<compile_context>
chip_gen: v7x
topology: tpu7x:2x2x1
jax: 0.10.0
libtpu: 0.0.40
codegen_flags: <defaults>
</compile_context>

<pallas_src>
import functools

import jax
import jax.numpy as jnp
from jax import lax
from jax.experimental import pallas as pl
from jax.experimental.pallas import tpu as pltpu

EPS = 1e-5  # nn.InstanceNorm2d default


# ---------------------------------------------------------------------------
# In-kernel helpers
# ---------------------------------------------------------------------------
def _instance_norm_relu(y, inv_s):
    """y: (C, S) f32. Per-channel (row) normalization over S, one-pass stats, ReLU."""
    s1 = jnp.sum(y, axis=-1, keepdims=True)
    s2 = jnp.sum(y * y, axis=-1, keepdims=True)
    mean = s1 * inv_s
    var = jnp.maximum(s2 * inv_s - mean * mean, 0.0)   # biased var, clamp tiny negatives
    return jnp.maximum((y - mean) * lax.rsqrt(var + EPS), 0.0)


def _conv3x3_taps(img, left_edge, right_edge, width):
    """img: (Ci, S) f32 with S = H*W row-major.

    Returns (9*Ci, S): the nine replicate-padded shifted copies of img, ordered
    tap-major (ky*3 + kx), channel-minor — matching the host-side weight fold.
    """
    # vertical shifts: pure lane-slice concats (row replication falls out for free)
    up = jnp.concatenate([img[:, :width], img[:, :-width]], axis=-1)    # reads (h-1, w)
    down = jnp.concatenate([img[:, width:], img[:, -width:]], axis=-1)  # reads (h+1, w)

    taps = []
    for v in (up, img, down):                                           # ky = 0, 1, 2
        left = jnp.where(left_edge, v,
                         jnp.concatenate([v[:, :1], v[:, :-1]], axis=-1))   # (., w-1)
        right = jnp.where(right_edge, v,
                          jnp.concatenate([v[:, 1:], v[:, -1:]], axis=-1))  # (., w+1)
        taps.extend([left, v, right])                                   # kx = 0, 1, 2
    return jnp.concatenate(taps, axis=0)


# ---------------------------------------------------------------------------
# Pallas kernel: one grid step == `images_per_step` batch elements, fully fused.
# ---------------------------------------------------------------------------
def _rdb_kernel(x_ref, *args, width):
    *conv_w_refs, wf_ref, o_ref, stacked_ref = args

    nb, c_in, s = x_ref.shape
    inv_s = 1.0 / s

    # Edge-column masks, hoisted out of all loops.
    col = lax.broadcasted_iota(jnp.int32, (1, s), 1) % width
    left_edge = col == 0
    right_edge = col == (width - 1)

    for b in range(nb):                                    # static, small
        x = x_ref[b].astype(jnp.float32)                   # (Cin, S)
        stacked_ref[0:c_in, :] = x

        c_off = c_in
        for w_ref in conv_w_refs:                          # static layer loop
            growth, k9 = w_ref.shape
            ci = k9 // 9
            cur = stacked_ref[0:ci, :]                     # leading channel slice
            patches = _conv3x3_taps(cur, left_edge, right_edge, width)   # (9*Ci, S)
            y = jnp.dot(w_ref[...], patches,
                        preferred_element_type=jnp.float32)              # (growth, S)
            y = _instance_norm_relu(y, inv_s)
            stacked_ref[c_off:c_off + growth, :] = y
            c_off += growth

        # local feature fusion: 1x1 conv == matmul over channels
        yf = jnp.dot(wf_ref[...], stacked_ref[...],
                     preferred_element_type=jnp.float32)                 # (Cout, S)
        yf = _instance_norm_relu(yf, inv_s)

        o_ref[b] = (x + yf).astype(o_ref.dtype)            # residual (Cin == Cout)


# ---------------------------------------------------------------------------
# Wrapper (PyTorch-compatible layouts: x NCHW, weights OIHW)
# ---------------------------------------------------------------------------
def residual_dense_block_2d(x, conv_weights, fusion_weight, *, images_per_step=1):
    """x: (N, Cin, H, W); conv_weights: list of (growth, Ci, 3, 3) OIHW;
    fusion_weight: (Cout, C_total, 1, 1) OIHW.  Returns (N, Cout, H, W)."""
    n, c_in, h, w = x.shape
    s = h * w
    c_out, c_total = fusion_weight.shape[0], fusion_weight.shape[1]
    if c_in != c_out:
        raise ValueError("residual add requires in_channels == out_channels")
    if n % images_per_step:
        raise ValueError("batch must be divisible by images_per_step")
    nb = images_per_step

    # Host-side weight folding: (g, Ci, 3, 3) -> (g, 9*Ci) with
    # K index = (ky*3 + kx)*Ci + ci, matching the in-kernel tap order.
    folded = [
        jnp.transpose(wc, (0, 2, 3, 1)).reshape(wc.shape[0], -1).astype(jnp.float32)
        for wc in conv_weights
    ]
    wf = fusion_weight.reshape(c_out, c_total).astype(jnp.float32)
    x_flat = x.reshape(n, c_in, s)

    in_specs = [pl.BlockSpec((nb, c_in, s), lambda i: (i, 0, 0))]
    in_specs += [pl.BlockSpec(fw.shape, lambda i: (0, 0)) for fw in folded]
    in_specs += [pl.BlockSpec(wf.shape, lambda i: (0, 0))]

    # Rough cost hint for the XLA scheduler.
    flops = 0
    ci = c_in
    for wc in conv_weights:
        g = wc.shape[0]
        flops += 2 * g * 9 * ci * s
        ci += g
    flops += 2 * c_out * c_total * s
    flops *= n
    bytes_accessed = 4 * (x_flat.size + n * c_out * s
                          + sum(int(fw.size) for fw in folded) + int(wf.size))
    cost = pl.CostEstimate(flops=int(flops),
                           transcendentals=int(n * (c_total - c_in + c_out)),
                           bytes_accessed=int(bytes_accessed))

    out_flat = pl.pallas_call(
        functools.partial(_rdb_kernel, width=w),
        out_shape=jax.ShapeDtypeStruct((n, c_out, s), x.dtype),
        grid_spec=pltpu.PrefetchScalarGridSpec(
            num_scalar_prefetch=0,
            grid=(n // nb,),
            in_specs=in_specs,
            out_specs=pl.BlockSpec((nb, c_out, s), lambda i: (i, 0, 0)),
            scratch_shapes=[pltpu.VMEM((c_total, s), jnp.float32)],
        ),
        compiler_params=pltpu.CompilerParams(
            dimension_semantics=("parallel",),
            vmem_limit_bytes=32 * 1024 * 1024,
        ),
        cost_estimate=cost,
    )(x_flat, *folded, wf)
    # TODO(synk): for very large H*W (real CBCT slices) add a spatial grid axis
    # with halo rows and two-pass instance-norm stats to fit v7x's 64 MiB VMEM.
    return out_flat.reshape(n, c_out, h, w)


# ---------------------------------------------------------------------------
# Pure-JAX reference (NCHW / OIHW, same math) for a sanity check
# ---------------------------------------------------------------------------
def _ref_conv_in_relu(x, w):
    pad = (w.shape[2] - 1) // 2
    if pad:
        x = jnp.pad(x, ((0, 0), (0, 0), (pad, pad), (pad, pad)), mode="edge")
    y = lax.conv_general_dilated(x, w, (1, 1), "VALID",
                                 dimension_numbers=("NCHW", "OIHW", "NCHW"))
    m = jnp.mean(y, axis=(2, 3), keepdims=True)
    v = jnp.mean((y - m) ** 2, axis=(2, 3), keepdims=True)
    return jnp.maximum((y - m) * lax.rsqrt(v + EPS), 0.0)


def _ref_forward(x, conv_weights, fusion_weight):
    outputs = []
    for w in conv_weights:
        stacked = jnp.concatenate([x] + outputs, axis=1)
        outputs.append(_ref_conv_in_relu(stacked, w))
    stacked = jnp.concatenate([x] + outputs, axis=1)
    return x + _ref_conv_in_relu(stacked, fusion_weight)


# ---------------------------------------------------------------------------
if __name__ == "__main__":
    # Small deterministic configuration. Residual add requires in_ch == out_ch.
    batch, in_channels, H, W = 2, 8, 16, 16
    out_channels, growth_rate, n_layers = 8, 4, 4

    key = jax.random.PRNGKey(0)
    k_x, *k_ws = jax.random.split(key, 2 + n_layers)

    x = jax.random.normal(k_x, (batch, in_channels, H, W), dtype=jnp.float32)

    conv_weights = []
    cin = in_channels
    for i in range(n_layers):
        fan_in = cin * 9
        wc = jax.random.normal(k_ws[i], (growth_rate, cin, 3, 3),
                               dtype=jnp.float32) * (1.0 / jnp.sqrt(fan_in))
        conv_weights.append(wc)
        cin = in_channels + (i + 1) * growth_rate

    wf = jax.random.normal(k_ws[-1], (out_channels, cin, 1, 1),
                           dtype=jnp.float32) * (1.0 / jnp.sqrt(cin))

    out = jax.block_until_ready(
        jax.jit(residual_dense_block_2d)(x, conv_weights, wf))

    ref = jax.block_until_ready(_ref_forward(x, conv_weights, wf))
    assert out.shape == (batch, out_channels, H, W)
    assert jnp.allclose(out, ref, atol=2e-2, rtol=2e-2)

    print("KERNEL_OK")
</pallas_src>

<mosaic_0001>
module attributes {stable_mosaic.version = 11 : i64} {
  func.func @_rdb_kernel(%arg0: i32, %arg1: memref<1x8x256xf32, #tpu.memory_space<vmem>>, %arg2: memref<4x72xf32, #tpu.memory_space<vmem>>, %arg3: memref<4x108xf32, #tpu.memory_space<vmem>>, %arg4: memref<4x144xf32, #tpu.memory_space<vmem>>, %arg5: memref<4x180xf32, #tpu.memory_space<vmem>>, %arg6: memref<8x24xf32, #tpu.memory_space<vmem>>, %arg7: memref<1x8x256xf32, #tpu.memory_space<vmem>>, %arg8: memref<24x256xf32, #tpu.memory_space<vmem>>) attributes {dimension_semantics = [#tpu.dimension_semantics<parallel>], iteration_bounds = array<i64: 2>, scalar_prefetch = 0 : i64, scratch_operands = 1 : i64, tpu.core_type = #tpu.core_type<tc>, window_params = [{transform_indices = @transform_0, window_bounds = array<i64: 1, 8, 256>}, {pipeline_mode = #tpu.pipeline_mode<synchronous>, transform_indices = @transform_1, window_bounds = array<i64: 4, 72>}, {pipeline_mode = #tpu.pipeline_mode<synchronous>, transform_indices = @transform_2, window_bounds = array<i64: 4, 108>}, {pipeline_mode = #tpu.pipeline_mode<synchronous>, transform_indices = @transform_3, window_bounds = array<i64: 4, 144>}, {pipeline_mode = #tpu.pipeline_mode<synchronous>, transform_indices = @transform_4, window_bounds = array<i64: 4, 180>}, {pipeline_mode = #tpu.pipeline_mode<synchronous>, transform_indices = @transform_5, window_bounds = array<i64: 8, 24>}, {transform_indices = @transform_6, window_bounds = array<i64: 1, 8, 256>}]} {
    %0 = tpu.iota {dimensions = array<i32: 1>} : vector<1x256xi32>
    %c16_i32 = arith.constant 16 : i32
    %c0_i32 = arith.constant 0 : i32
    %1 = arith.cmpi eq, %c16_i32, %c0_i32 : i32
    %c1_i32 = arith.constant 1 : i32
    %2 = arith.select %1, %c1_i32, %c16_i32 : i32
    %3 = vector.broadcast %2 : i32 to vector<1x256xi32>
    %4 = arith.remsi %0, %3 : vector<1x256xi32>
    %c0_i32_0 = arith.constant 0 : i32
    %5 = vector.broadcast %c0_i32_0 : i32 to vector<1x256xi32>
    %6 = arith.cmpi ne, %4, %5 : vector<1x256xi32>
    %c0_i32_1 = arith.constant 0 : i32
    %7 = vector.broadcast %c0_i32_1 : i32 to vector<1x256xi32>
    %8 = arith.cmpi slt, %4, %7 : vector<1x256xi32>
    %c0_i32_2 = arith.constant 0 : i32
    %9 = arith.cmpi slt, %2, %c0_i32_2 : i32
    %10 = vector.broadcast %9 : i1 to vector<1x256xi1>
    %11 = vector.broadcast %10 : vector<1x256xi1> to vector<1x256xi1>
    %12 = arith.xori %8, %11 : vector<1x256xi1>
    %13 = arith.andi %12, %6 : vector<1x256xi1>
    %14 = vector.broadcast %2 : i32 to vector<1x256xi32>
    %15 = arith.addi %4, %14 : vector<1x256xi32>
    %16 = arith.select %13, %15, %4 : vector<1x256xi1>, vector<1x256xi32>
    %c0_i32_3 = arith.constant 0 : i32
    %17 = vector.broadcast %c0_i32_3 : i32 to vector<1x256xi32>
    %18 = arith.cmpi eq, %16, %17 : vector<1x256xi32>
    %c15_i32 = arith.constant 15 : i32
    %19 = vector.broadcast %c15_i32 : i32 to vector<1x256xi32>
    %20 = arith.cmpi eq, %16, %19 : vector<1x256xi32>
    %c0 = arith.constant 0 : index
    %c0_4 = arith.constant 0 : index
    %c0_5 = arith.constant 0 : index
    %21 = vector.load %arg1[%c0, %c0_4, %c0_5] : memref<1x8x256xf32, #tpu.memory_space<vmem>>, vector<1x8x256xf32>
    %22 = vector.shape_cast %21 : vector<1x8x256xf32> to vector<8x256xf32>
    %c0_6 = arith.constant 0 : index
    %c0_7 = arith.constant 0 : index
    %23 = vector.load %arg8[%c0_6, %c0_7] : memref<24x256xf32, #tpu.memory_space<vmem>>, vector<8x256xf32>
    tpu.vector_store %arg8[%c0_6, %c0_7], %22 {strides = array<i32>} : memref<24x256xf32, #tpu.memory_space<vmem>>, vector<8x256xf32>,
    %c0_8 = arith.constant 0 : index
    %c0_9 = arith.constant 0 : index
    %24 = vector.load %arg8[%c0_8, %c0_9] : memref<24x256xf32, #tpu.memory_space<vmem>>, vector<8x256xf32>
    %25 = vector.extract_strided_slice %24 {offsets = [0, 0], sizes = [8, 16], strides = [1, 1]} : vector<8x256xf32> to vector<8x16xf32>
    %26 = vector.extract_strided_slice %24 {offsets = [0, 0], sizes = [8, 240], strides = [1, 1]} : vector<8x256xf32> to vector<8x240xf32>
    %27 = tpu.concatenate %25, %26 in 1 : vector<8x16xf32>, vector<8x240xf32> -> vector<8x256xf32>
    %28 = vector.extract_strided_slice %24 {offsets = [0, 16], sizes = [8, 240], strides = [1, 1]} : vector<8x256xf32> to vector<8x240xf32>
    %29 = vector.extract_strided_slice %24 {offsets = [0, 240], sizes = [8, 16], strides = [1, 1]} : vector<8x256xf32> to vector<8x16xf32>
    %30 = tpu.concatenate %28, %29 in 1 : vector<8x240xf32>, vector<8x16xf32> -> vector<8x256xf32>
    %31 = vector.extract_strided_slice %27 {offsets = [0, 0], sizes = [8, 1], strides = [1, 1]} : vector<8x256xf32> to vector<8x1xf32>
    %32 = vector.extract_strided_slice %27 {offsets = [0, 0], sizes = [8, 255], strides = [1, 1]} : vector<8x256xf32> to vector<8x255xf32>
    %33 = tpu.concatenate %31, %32 in 1 : vector<8x1xf32>, vector<8x255xf32> -> vector<8x256xf32>
    %34 = vector.shape_cast %18 : vector<1x256xi1> to vector<1x256xi1>
    %35 = vector.broadcast %34 : vector<1x256xi1> to vector<8x256xi1>
    %36 = arith.select %35, %27, %33 : vector<8x256xi1>, vector<8x256xf32>
    %37 = vector.extract_strided_slice %27 {offsets = [0, 1], sizes = [8, 255], strides = [1, 1]} : vector<8x256xf32> to vector<8x255xf32>
    %38 = vector.extract_strided_slice %27 {offsets = [0, 255], sizes = [8, 1], strides = [1, 1]} : vector<8x256xf32> to vector<8x1xf32>
    %39 = tpu.concatenate %37, %38 in 1 : vector<8x255xf32>, vector<8x1xf32> -> vector<8x256xf32>
    %40 = vector.shape_cast %20 : vector<1x256xi1> to vector<1x256xi1>
    %41 = vector.broadcast %40 : vector<1x256xi1> to vector<8x256xi1>
    %42 = arith.select %41, %27, %39 : vector<8x256xi1>, vector<8x256xf32>
    %43 = vector.extract_strided_slice %24 {offsets = [0, 0], sizes = [8, 1], strides = [1, 1]} : vector<8x256xf32> to vector<8x1xf32>
    %44 = vector.extract_strided_slice %24 {offsets = [0, 0], sizes = [8, 255], strides = [1, 1]} : vector<8x256xf32> to vector<8x255xf32>
    %45 = tpu.concatenate %43, %44 in 1 : vector<8x1xf32>, vector<8x255xf32> -> vector<8x256xf32>
    %46 = vector.shape_cast %18 : vector<1x256xi1> to vector<1x256xi1>
    %47 = vector.broadcast %46 : vector<1x256xi1> to vector<8x256xi1>
    %48 = arith.select %47, %24, %45 : vector<8x256xi1>, vector<8x256xf32>
    %49 = vector.extract_strided_slice %24 {offsets = [0, 1], sizes = [8, 255], strides = [1, 1]} : vector<8x256xf32> to vector<8x255xf32>
    %50 = vector.extract_strided_slice %24 {offsets = [0, 255], sizes = [8, 1], strides = [1, 1]} : vector<8x256xf32> to vector<8x1xf32>
    %51 = tpu.concatenate %49, %50 in 1 : vector<8x255xf32>, vector<8x1xf32> -> vector<8x256xf32>
    %52 = vector.shape_cast %20 : vector<1x256xi1> to vector<1x256xi1>
    %53 = vector.broadcast %52 : vector<1x256xi1> to vector<8x256xi1>
    %54 = arith.select %53, %24, %51 : vector<8x256xi1>, vector<8x256xf32>
    %55 = vector.extract_strided_slice %30 {offsets = [0, 0], sizes = [8, 1], strides = [1, 1]} : vector<8x256xf32> to vector<8x1xf32>
    %56 = vector.extract_strided_slice %30 {offsets = [0, 0], sizes = [8, 255], strides = [1, 1]} : vector<8x256xf32> to vector<8x255xf32>
    %57 = tpu.concatenate %55, %56 in 1 : vector<8x1xf32>, vector<8x255xf32> -> vector<8x256xf32>
    %58 = vector.shape_cast %18 : vector<1x256xi1> to vector<1x256xi1>
    %59 = vector.broadcast %58 : vector<1x256xi1> to vector<8x256xi1>
    %60 = arith.select %59, %30, %57 : vector<8x256xi1>, vector<8x256xf32>
    %61 = vector.extract_strided_slice %30 {offsets = [0, 1], sizes = [8, 255], strides = [1, 1]} : vector<8x256xf32> to vector<8x255xf32>
    %62 = vector.extract_strided_slice %30 {offsets = [0, 255], sizes = [8, 1], strides = [1, 1]} : vector<8x256xf32> to vector<8x1xf32>
    %63 = tpu.concatenate %61, %62 in 1 : vector<8x255xf32>, vector<8x1xf32> -> vector<8x256xf32>
    %64 = vector.shape_cast %20 : vector<1x256xi1> to vector<1x256xi1>
    %65 = vector.broadcast %64 : vector<1x256xi1> to vector<8x256xi1>
    %66 = arith.select %65, %30, %63 : vector<8x256xi1>, vector<8x256xf32>
    %67 = tpu.concatenate %36, %27, %42, %48, %24, %54, %60, %30, %66 in 0 : vector<8x256xf32>, vector<8x256xf32>, vector<8x256xf32>, vector<8x256xf32>, vector<8x256xf32>, vector<8x256xf32>, vector<8x256xf32>, vector<8x256xf32>, vector<8x256xf32> -> vector<72x256xf32>
    %c0_10 = arith.constant 0 : index
    %c0_11 = arith.constant 0 : index
    %68 = vector.load %arg2[%c0_10, %c0_11] : memref<4x72xf32, #tpu.memory_space<vmem>>, vector<4x72xf32>
    %cst = arith.constant dense<0.000000e+00> : vector<4x256xf32>
    %69 = tpu.matmul %68, %67, %cst {dimension_numbers = #tpu.dot_dimension_numbers<[1], [0], [0], [1], [0, 0, 1, 1], [], []>} : vector<4x72xf32>, vector<72x256xf32>, vector<4x256xf32> -> vector<4x256xf32>
    %cst_12 = arith.constant dense<0.000000e+00> : vector<4xf32>
    %70 = vector.multi_reduction <add>, %69, %cst_12 [1] : vector<4x256xf32> to vector<4xf32>
    %71 = vector.shape_cast %70 : vector<4xf32> to vector<4x1xf32>
    %72 = arith.mulf %69, %69 : vector<4x256xf32>
    %cst_13 = arith.constant dense<0.000000e+00> : vector<4xf32>
    %73 = vector.multi_reduction <add>, %72, %cst_13 [1] : vector<4x256xf32> to vector<4xf32>
    %74 = vector.shape_cast %73 : vector<4xf32> to vector<4x1xf32>
    %cst_14 = arith.constant 3.906250e-03 : f32
    %75 = vector.broadcast %cst_14 : f32 to vector<4x1xf32>
    %76 = arith.mulf %71, %75 : vector<4x1xf32>
    %cst_15 = arith.constant 3.906250e-03 : f32
    %77 = vector.broadcast %cst_15 : f32 to vector<4x1xf32>
    %78 = arith.mulf %74, %77 : vector<4x1xf32>
    %79 = arith.mulf %76, %76 : vector<4x1xf32>
    %80 = arith.subf %78, %79 : vector<4x1xf32>
    %cst_16 = arith.constant 0.000000e+00 : f32
    %81 = vector.broadcast %cst_16 : f32 to vector<4x1xf32>
    %82 = arith.maximumf %80, %81 : vector<4x1xf32>
    %83 = vector.broadcast %76 : vector<4x1xf32> to vector<4x256xf32>
    %84 = arith.subf %69, %83 : vector<4x256xf32>
    %cst_17 = arith.constant 9.99999974E-6 : f32
    %85 = vector.broadcast %cst_17 : f32 to vector<4x1xf32>
    %86 = arith.addf %82, %85 : vector<4x1xf32>
    %87 = math.rsqrt %86 : vector<4x1xf32>
    %88 = vector.broadcast %87 : vector<4x1xf32> to vector<4x256xf32>
    %89 = arith.mulf %84, %88 : vector<4x256xf32>
    %cst_18 = arith.constant 0.000000e+00 : f32
    %90 = vector.broadcast %cst_18 : f32 to vector<4x256xf32>
    %91 = arith.maximumf %89, %90 : vector<4x256xf32>
    %c8 = arith.constant 8 : index
    %c0_19 = arith.constant 0 : index
    %92 = vector.load %arg8[%c8, %c0_19] : memref<24x256xf32, #tpu.memory_space<vmem>>, vector<4x256xf32>
    tpu.vector_store %arg8[%c8, %c0_19], %91 {strides = array<i32>} : memref<24x256xf32, #tpu.memory_space<vmem>>, vector<4x256xf32>,
    %c0_20 = arith.constant 0 : index
    %c0_21 = arith.constant 0 : index
    %93 = vector.load %arg8[%c0_20, %c0_21] : memref<24x256xf32, #tpu.memory_space<vmem>>, vector<12x256xf32>
    %94 = vector.extract_strided_slice %93 {offsets = [0, 0], sizes = [12, 16], strides = [1, 1]} : vector<12x256xf32> to vector<12x16xf32>
    %95 = vector.extract_strided_slice %93 {offsets = [0, 0], sizes = [12, 240], strides = [1, 1]} : vector<12x256xf32> to vector<12x240xf32>
    %96 = tpu.concatenate %94, %95 in 1 : vector<12x16xf32>, vector<12x240xf32> -> vector<12x256xf32>
    %97 = vector.extract_strided_slice %93 {offsets = [0, 16], sizes = [12, 240], strides = [1, 1]} : vector<12x256xf32> to vector<12x240xf32>
    %98 = vector.extract_strided_slice %93 {offsets = [0, 240], sizes = [12, 16], strides = [1, 1]} : vector<12x256xf32> to vector<12x16xf32>
    %99 = tpu.concatenate %97, %98 in 1 : vector<12x240xf32>, vector<12x16xf32> -> vector<12x256xf32>
    %100 = vector.extract_strided_slice %96 {offsets = [0, 0], sizes = [12, 1], strides = [1, 1]} : vector<12x256xf32> to vector<12x1xf32>
    %101 = vector.extract_strided_slice %96 {offsets = [0, 0], sizes = [12, 255], strides = [1, 1]} : vector<12x256xf32> to vector<12x255xf32>
    %102 = tpu.concatenate %100, %101 in 1 : vector<12x1xf32>, vector<12x255xf32> -> vector<12x256xf32>
    %103 = vector.shape_cast %18 : vector<1x256xi1> to vector<1x256xi1>
    %104 = vector.broadcast %103 : vector<1x256xi1> to vector<12x256xi1>
    %105 = arith.select %104, %96, %102 : vector<12x256xi1>, vector<12x256xf32>
    %106 = vector.extract_strided_slice %96 {offsets = [0, 1], sizes = [12, 255], strides = [1, 1]} : vector<12x256xf32> to vector<12x255xf32>
    %107 = vector.extract_strided_slice %96 {offsets = [0, 255], sizes = [12, 1], strides = [1, 1]} : vector<12x256xf32> to vector<12x1xf32>
    %108 = tpu.concatenate %106, %107 in 1 : vector<12x255xf32>, vector<12x1xf32> -> vector<12x256xf32>
    %109 = vector.shape_cast %20 : vector<1x256xi1> to vector<1x256xi1>
    %110 = vector.broadcast %109 : vector<1x256xi1> to vector<12x256xi1>
    %111 = arith.select %110, %96, %108 : vector<12x256xi1>, vector<12x256xf32>
    %112 = vector.extract_strided_slice %93 {offsets = [0, 0], sizes = [12, 1], strides = [1, 1]} : vector<12x256xf32> to vector<12x1xf32>
    %113 = vector.extract_strided_slice %93 {offsets = [0, 0], sizes = [12, 255], strides = [1, 1]} : vector<12x256xf32> to vector<12x255xf32>
    %114 = tpu.concatenate %112, %113 in 1 : vector<12x1xf32>, vector<12x255xf32> -> vector<12x256xf32>
    %115 = vector.shape_cast %18 : vector<1x256xi1> to vector<1x256xi1>
    %116 = vector.broadcast %115 : vector<1x256xi1> to vector<12x256xi1>
    %117 = arith.select %116, %93, %114 : vector<12x256xi1>, vector<12x256xf32>
    %118 = vector.extract_strided_slice %93 {offsets = [0, 1], sizes = [12, 255], strides = [1, 1]} : vector<12x256xf32> to vector<12x255xf32>
    %119 = vector.extract_strided_slice %93 {offsets = [0, 255], sizes = [12, 1], strides = [1, 1]} : vector<12x256xf32> to vector<12x1xf32>
    %120 = tpu.concatenate %118, %119 in 1 : vector<12x255xf32>, vector<12x1xf32> -> vector<12x256xf32>
    %121 = vector.shape_cast %20 : vector<1x256xi1> to vector<1x256xi1>
    %122 = vector.broadcast %121 : vector<1x256xi1> to vector<12x256xi1>
    %123 = arith.select %122, %93, %120 : vector<12x256xi1>, vector<12x256xf32>
    %124 = vector.extract_strided_slice %99 {offsets = [0, 0], sizes = [12, 1], strides = [1, 1]} : vector<12x256xf32> to vector<12x1xf32>
    %125 = vector.extract_strided_slice %99 {offsets = [0, 0], sizes = [12, 255], strides = [1, 1]} : vector<12x256xf32> to vector<12x255xf32>
    %126 = tpu.concatenate %124, %125 in 1 : vector<12x1xf32>, vector<12x255xf32> -> vector<12x256xf32>
    %127 = vector.shape_cast %18 : vector<1x256xi1> to vector<1x256xi1>
    %128 = vector.broadcast %127 : vector<1x256xi1> to vector<12x256xi1>
    %129 = arith.select %128, %99, %126 : vector<12x256xi1>, vector<12x256xf32>
    %130 = vector.extract_strided_slice %99 {offsets = [0, 1], sizes = [12, 255], strides = [1, 1]} : vector<12x256xf32> to vector<12x255xf32>
    %131 = vector.extract_strided_slice %99 {offsets = [0, 255], sizes = [12, 1], strides = [1, 1]} : vector<12x256xf32> to vector<12x1xf32>
    %132 = tpu.concatenate %130, %131 in 1 : vector<12x255xf32>, vector<12x1xf32> -> vector<12x256xf32>
    %133 = vector.shape_cast %20 : vector<1x256xi1> to vector<1x256xi1>
    %134 = vector.broadcast %133 : vector<1x256xi1> to vector<12x256xi1>
    %135 = arith.select %134, %99, %132 : vector<12x256xi1>, vector<12x256xf32>
    %136 = tpu.concatenate %105, %96, %111, %117, %93, %123, %129, %99, %135 in 0 : vector<12x256xf32>, vector<12x256xf32>, vector<12x256xf32>, vector<12x256xf32>, vector<12x256xf32>, vector<12x256xf32>, vector<12x256xf32>, vector<12x256xf32>, vector<12x256xf32> -> vector<108x256xf32>
    %c0_22 = arith.constant 0 : index
    %c0_23 = arith.constant 0 : index
    %137 = vector.load %arg3[%c0_22, %c0_23] : memref<4x108xf32, #tpu.memory_space<vmem>>, vector<4x108xf32>
    %cst_24 = arith.constant dense<0.000000e+00> : vector<4x256xf32>
    %138 = tpu.matmul %137, %136, %cst_24 {dimension_numbers = #tpu.dot_dimension_numbers<[1], [0], [0], [1], [0, 0, 1, 1], [], []>} : vector<4x108xf32>, vector<108x256xf32>, vector<4x256xf32> -> vector<4x256xf32>
    %cst_25 = arith.constant dense<0.000000e+00> : vector<4xf32>
    %139 = vector.multi_reduction <add>, %138, %cst_25 [1] : vector<4x256xf32> to vector<4xf32>
    %140 = vector.shape_cast %139 : vector<4xf32> to vector<4x1xf32>
    %141 = arith.mulf %138, %138 : vector<4x256xf32>
    %cst_26 = arith.constant dense<0.000000e+00> : vector<4xf32>
    %142 = vector.multi_reduction <add>, %141, %cst_26 [1] : vector<4x256xf32> to vector<4xf32>
    %143 = vector.shape_cast %142 : vector<4xf32> to vector<4x1xf32>
    %cst_27 = arith.constant 3.906250e-03 : f32
    %144 = vector.broadcast %cst_27 : f32 to vector<4x1xf32>
    %145 = arith.mulf %140, %144 : vector<4x1xf32>
    %cst_28 = arith.constant 3.906250e-03 : f32
    %146 = vector.broadcast %cst_28 : f32 to vector<4x1xf32>
    %147 = arith.mulf %143, %146 : vector<4x1xf32>
    %148 = arith.mulf %145, %145 : vector<4x1xf32>
    %149 = arith.subf %147, %148 : vector<4x1xf32>
    %cst_29 = arith.constant 0.000000e+00 : f32
    %150 = vector.broadcast %cst_29 : f32 to vector<4x1xf32>
    %151 = arith.maximumf %149, %150 : vector<4x1xf32>
    %152 = vector.broadcast %145 : vector<4x1xf32> to vector<4x256xf32>
    %153 = arith.subf %138, %152 : vector<4x256xf32>
    %cst_30 = arith.constant 9.99999974E-6 : f32
    %154 = vector.broadcast %cst_30 : f32 to vector<4x1xf32>
    %155 = arith.addf %151, %154 : vector<4x1xf32>
    %156 = math.rsqrt %155 : vector<4x1xf32>
    %157 = vector.broadcast %156 : vector<4x1xf32> to vector<4x256xf32>
    %158 = arith.mulf %153, %157 : vector<4x256xf32>
    %cst_31 = arith.constant 0.000000e+00 : f32
    %159 = vector.broadcast %cst_31 : f32 to vector<4x256xf32>
    %160 = arith.maximumf %158, %159 : vector<4x256xf32>
    %c12 = arith.constant 12 : index
    %c0_32 = arith.constant 0 : index
    %161 = vector.load %arg8[%c12, %c0_32] : memref<24x256xf32, #tpu.memory_space<vmem>>, vector<4x256xf32>
    tpu.vector_store %arg8[%c12, %c0_32], %160 {strides = array<i32>} : memref<24x256xf32, #tpu.memory_space<vmem>>, vector<4x256xf32>,
    %c0_33 = arith.constant 0 : index
    %c0_34 = arith.constant 0 : index
    %162 = vector.load %arg8[%c0_33, %c0_34] : memref<24x256xf32, #tpu.memory_space<vmem>>, vector<16x256xf32>
    %163 = vector.extract_strided_slice %162 {offsets = [0, 0], sizes = [16, 16], strides = [1, 1]} : vector<16x256xf32> to vector<16x16xf32>
    %164 = vector.extract_strided_slice %162 {offsets = [0, 0], sizes = [16, 240], strides = [1, 1]} : vector<16x256xf32> to vector<16x240xf32>
    %165 = tpu.concatenate %163, %164 in 1 : vector<16x16xf32>, vector<16x240xf32> -> vector<16x256xf32>
    %166 = vector.extract_strided_slice %162 {offsets = [0, 16], sizes = [16, 240], strides = [1, 1]} : vector<16x256xf32> to vector<16x240xf32>
    %167 = vector.extract_strided_slice %162 {offsets = [0, 240], sizes = [16, 16], strides = [1, 1]} : vector<16x256xf32> to vector<16x16xf32>
    %168 = tpu.concatenate %166, %167 in 1 : vector<16x240xf32>, vector<16x16xf32> -> vector<16x256xf32>
    %169 = vector.extract_strided_slice %165 {offsets = [0, 0], sizes = [16, 1], strides = [1, 1]} : vector<16x256xf32> to vector<16x1xf32>
    %170 = vector.extract_strided_slice %165 {offsets = [0, 0], sizes = [16, 255], strides = [1, 1]} : vector<16x256xf32> to vector<16x255xf32>
    %171 = tpu.concatenate %169, %170 in 1 : vector<16x1xf32>, vector<16x255xf32> -> vector<16x256xf32>
    %172 = vector.shape_cast %18 : vector<1x256xi1> to vector<1x256xi1>
    %173 = vector.broadcast %172 : vector<1x256xi1> to vector<16x256xi1>
    %174 = arith.select %173, %165, %171 : vector<16x256xi1>, vector<16x256xf32>
    %175 = vector.extract_strided_slice %165 {offsets = [0, 1], sizes = [16, 255], strides = [1, 1]} : vector<16x256xf32> to vector<16x255xf32>
    %176 = vector.extract_strided_slice %165 {offsets = [0, 255], sizes = [16, 1], strides = [1, 1]} : vector<16x256xf32> to vector<16x1xf32>
    %177 = tpu.concatenate %175, %176 in 1 : vector<16x255xf32>, vector<16x1xf32> -> vector<16x256xf32>
    %178 = vector.shape_cast %20 : vector<1x256xi1> to vector<1x256xi1>
    %179 = vector.broadcast %178 : vector<1x256xi1> to vector<16x256xi1>
    %180 = arith.select %179, %165, %177 : vector<16x256xi1>, vector<16x256xf32>
    %181 = vector.extract_strided_slice %162 {offsets = [0, 0], sizes = [16, 1], strides = [1, 1]} : vector<16x256xf32> to vector<16x1xf32>
    %182 = vector.extract_strided_slice %162 {offsets = [0, 0], sizes = [16, 255], strides = [1, 1]} : vector<16x256xf32> to vector<16x255xf32>
    %183 = tpu.concatenate %181, %182 in 1 : vector<16x1xf32>, vector<16x255xf32> -> vector<16x256xf32>
    %184 = vector.shape_cast %18 : vector<1x256xi1> to vector<1x256xi1>
    %185 = vector.broadcast %184 : vector<1x256xi1> to vector<16x256xi1>
    %186 = arith.select %185, %162, %183 : vector<16x256xi1>, vector<16x256xf32>
    %187 = vector.extract_strided_slice %162 {offsets = [0, 1], sizes = [16, 255], strides = [1, 1]} : vector<16x256xf32> to vector<16x255xf32>
    %188 = vector.extract_strided_slice %162 {offsets = [0, 255], sizes = [16, 1], strides = [1, 1]} : vector<16x256xf32> to vector<16x1xf32>
    %189 = tpu.concatenate %187, %188 in 1 : vector<16x255xf32>, vector<16x1xf32> -> vector<16x256xf32>
    %190 = vector.shape_cast %20 : vector<1x256xi1> to vector<1x256xi1>
    %191 = vector.broadcast %190 : vector<1x256xi1> to vector<16x256xi1>
    %192 = arith.select %191, %162, %189 : vector<16x256xi1>, vector<16x256xf32>
    %193 = vector.extract_strided_slice %168 {offsets = [0, 0], sizes = [16, 1], strides = [1, 1]} : vector<16x256xf32> to vector<16x1xf32>
    %194 = vector.extract_strided_slice %168 {offsets = [0, 0], sizes = [16, 255], strides = [1, 1]} : vector<16x256xf32> to vector<16x255xf32>
    %195 = tpu.concatenate %193, %194 in 1 : vector<16x1xf32>, vector<16x255xf32> -> vector<16x256xf32>
    %196 = vector.shape_cast %18 : vector<1x256xi1> to vector<1x256xi1>
    %197 = vector.broadcast %196 : vector<1x256xi1> to vector<16x256xi1>
    %198 = arith.select %197, %168, %195 : vector<16x256xi1>, vector<16x256xf32>
    %199 = vector.extract_strided_slice %168 {offsets = [0, 1], sizes = [16, 255], strides = [1, 1]} : vector<16x256xf32> to vector<16x255xf32>
    %200 = vector.extract_strided_slice %168 {offsets = [0, 255], sizes = [16, 1], strides = [1, 1]} : vector<16x256xf32> to vector<16x1xf32>
    %201 = tpu.concatenate %199, %200 in 1 : vector<16x255xf32>, vector<16x1xf32> -> vector<16x256xf32>
    %202 = vector.shape_cast %20 : vector<1x256xi1> to vector<1x256xi1>
    %203 = vector.broadcast %202 : vector<1x256xi1> to vector<16x256xi1>
    %204 = arith.select %203, %168, %201 : vector<16x256xi1>, vector<16x256xf32>
    %205 = tpu.concatenate %174, %165, %180, %186, %162, %192, %198, %168, %204 in 0 : vector<16x256xf32>, vector<16x256xf32>, vector<16x256xf32>, vector<16x256xf32>, vector<16x256xf32>, vector<16x256xf32>, vector<16x256xf32>, vector<16x256xf32>, vector<16x256xf32> -> vector<144x256xf32>
    %c0_35 = arith.constant 0 : index
    %c0_36 = arith.constant 0 : index
    %206 = vector.load %arg4[%c0_35, %c0_36] : memref<4x144xf32, #tpu.memory_space<vmem>>, vector<4x144xf32>
    %cst_37 = arith.constant dense<0.000000e+00> : vector<4x256xf32>
    %207 = tpu.matmul %206, %205, %cst_37 {dimension_numbers = #tpu.dot_dimension_numbers<[1], [0], [0], [1], [0, 0, 1, 1], [], []>} : vector<4x144xf32>, vector<144x256xf32>, vector<4x256xf32> -> vector<4x256xf32>
    %cst_38 = arith.constant dense<0.000000e+00> : vector<4xf32>
    %208 = vector.multi_reduction <add>, %207, %cst_38 [1] : vector<4x256xf32> to vector<4xf32>
    %209 = vector.shape_cast %208 : vector<4xf32> to vector<4x1xf32>
    %210 = arith.mulf %207, %207 : vector<4x256xf32>
    %cst_39 = arith.constant dense<0.000000e+00> : vector<4xf32>
    %211 = vector.multi_reduction <add>, %210, %cst_39 [1] : vector<4x256xf32> to vector<4xf32>
    %212 = vector.shape_cast %211 : vector<4xf32> to vector<4x1xf32>
    %cst_40 = arith.constant 3.906250e-03 : f32
    %213 = vector.broadcast %cst_40 : f32 to vector<4x1xf32>
    %214 = arith.mulf %209, %213 : vector<4x1xf32>
    %cst_41 = arith.constant 3.906250e-03 : f32
    %215 = vector.broadcast %cst_41 : f32 to vector<4x1xf32>
    %216 = arith.mulf %212, %215 : vector<4x1xf32>
    %217 = arith.mulf %214, %214 : vector<4x1xf32>
    %218 = arith.subf %216, %217 : vector<4x1xf32>
    %cst_42 = arith.constant 0.000000e+00 : f32
    %219 = vector.broadcast %cst_42 : f32 to vector<4x1xf32>
    %220 = arith.maximumf %218, %219 : vector<4x1xf32>
    %221 = vector.broadcast %214 : vector<4x1xf32> to vector<4x256xf32>
    %222 = arith.subf %207, %221 : vector<4x256xf32>
    %cst_43 = arith.constant 9.99999974E-6 : f32
    %223 = vector.broadcast %cst_43 : f32 to vector<4x1xf32>
    %224 = arith.addf %220, %223 : vector<4x1xf32>
    %225 = math.rsqrt %224 : vector<4x1xf32>
    %226 = vector.broadcast %225 : vector<4x1xf32> to vector<4x256xf32>
    %227 = arith.mulf %222, %226 : vector<4x256xf32>
    %cst_44 = arith.constant 0.000000e+00 : f32
    %228 = vector.broadcast %cst_44 : f32 to vector<4x256xf32>
    %229 = arith.maximumf %227, %228 : vector<4x256xf32>
    %c16 = arith.constant 16 : index
    %c0_45 = arith.constant 0 : index
    %230 = vector.load %arg8[%c16, %c0_45] : memref<24x256xf32, #tpu.memory_space<vmem>>, vector<4x256xf32>
    tpu.vector_store %arg8[%c16, %c0_45], %229 {strides = array<i32>} : memref<24x256xf32, #tpu.memory_space<vmem>>, vector<4x256xf32>,
    %c0_46 = arith.constant 0 : index
    %c0_47 = arith.constant 0 : index
    %231 = vector.load %arg8[%c0_46, %c0_47] : memref<24x256xf32, #tpu.memory_space<vmem>>, vector<20x256xf32>
    %232 = vector.extract_strided_slice %231 {offsets = [0, 0], sizes = [20, 16], strides = [1, 1]} : vector<20x256xf32> to vector<20x16xf32>
    %233 = vector.extract_strided_slice %231 {offsets = [0, 0], sizes = [20, 240], strides = [1, 1]} : vector<20x256xf32> to vector<20x240xf32>
    %234 = tpu.concatenate %232, %233 in 1 : vector<20x16xf32>, vector<20x240xf32> -> vector<20x256xf32>
    %235 = vector.extract_strided_slice %231 {offsets = [0, 16], sizes = [20, 240], strides = [1, 1]} : vector<20x256xf32> to vector<20x240xf32>
    %236 = vector.extract_strided_slice %231 {offsets = [0, 240], sizes = [20, 16], strides = [1, 1]} : vector<20x256xf32> to vector<20x16xf32>
    %237 = tpu.concatenate %235, %236 in 1 : vector<20x240xf32>, vector<20x16xf32> -> vector<20x256xf32>
    %238 = vector.extract_strided_slice %234 {offsets = [0, 0], sizes = [20, 1], strides = [1, 1]} : vector<20x256xf32> to vector<20x1xf32>
    %239 = vector.extract_strided_slice %234 {offsets = [0, 0], sizes = [20, 255], strides = [1, 1]} : vector<20x256xf32> to vector<20x255xf32>
    %240 = tpu.concatenate %238, %239 in 1 : vector<20x1xf32>, vector<20x255xf32> -> vector<20x256xf32>
    %241 = vector.shape_cast %18 : vector<1x256xi1> to vector<1x256xi1>
    %242 = vector.broadcast %241 : vector<1x256xi1> to vector<20x256xi1>
    %243 = arith.select %242, %234, %240 : vector<20x256xi1>, vector<20x256xf32>
    %244 = vector.extract_strided_slice %234 {offsets = [0, 1], sizes = [20, 255], strides = [1, 1]} : vector<20x256xf32> to vector<20x255xf32>
    %245 = vector.extract_strided_slice %234 {offsets = [0, 255], sizes = [20, 1], strides = [1, 1]} : vector<20x256xf32> to vector<20x1xf32>
    %246 = tpu.concatenate %244, %245 in 1 : vector<20x255xf32>, vector<20x1xf32> -> vector<20x256xf32>
    %247 = vector.shape_cast %20 : vector<1x256xi1> to vector<1x256xi1>
    %248 = vector.broadcast %247 : vector<1x256xi1> to vector<20x256xi1>
    %249 = arith.select %248, %234, %246 : vector<20x256xi1>, vector<20x256xf32>
    %250 = vector.extract_strided_slice %231 {offsets = [0, 0], sizes = [20, 1], strides = [1, 1]} : vector<20x256xf32> to vector<20x1xf32>
    %251 = vector.extract_strided_slice %231 {offsets = [0, 0], sizes = [20, 255], strides = [1, 1]} : vector<20x256xf32> to vector<20x255xf32>
    %252 = tpu.concatenate %250, %251 in 1 : vector<20x1xf32>, vector<20x255xf32> -> vector<20x256xf32>
    %253 = vector.shape_cast %18 : vector<1x256xi1> to vector<1x256xi1>
    %254 = vector.broadcast %253 : vector<1x256xi1> to vector<20x256xi1>
    %255 = arith.select %254, %231, %252 : vector<20x256xi1>, vector<20x256xf32>
    %256 = vector.extract_strided_slice %231 {offsets = [0, 1], sizes = [20, 255], strides = [1, 1]} : vector<20x256xf32> to vector<20x255xf32>
    %257 = vector.extract_strided_slice %231 {offsets = [0, 255], sizes = [20, 1], strides = [1, 1]} : vector<20x256xf32> to vector<20x1xf32>
    %258 = tpu.concatenate %256, %257 in 1 : vector<20x255xf32>, vector<20x1xf32> -> vector<20x256xf32>
    %259 = vector.shape_cast %20 : vector<1x256xi1> to vector<1x256xi1>
    %260 = vector.broadcast %259 : vector<1x256xi1> to vector<20x256xi1>
    %261 = arith.select %260, %231, %258 : vector<20x256xi1>, vector<20x256xf32>
    %262 = vector.extract_strided_slice %237 {offsets = [0, 0], sizes = [20, 1], strides = [1, 1]} : vector<20x256xf32> to vector<20x1xf32>
    %263 = vector.extract_strided_slice %237 {offsets = [0, 0], sizes = [20, 255], strides = [1, 1]} : vector<20x256xf32> to vector<20x255xf32>
    %264 = tpu.concatenate %262, %263 in 1 : vector<20x1xf32>, vector<20x255xf32> -> vector<20x256xf32>
    %265 = vector.shape_cast %18 : vector<1x256xi1> to vector<1x256xi1>
    %266 = vector.broadcast %265 : vector<1x256xi1> to vector<20x256xi1>
    %267 = arith.select %266, %237, %264 : vector<20x256xi1>, vector<20x256xf32>
    %268 = vector.extract_strided_slice %237 {offsets = [0, 1], sizes = [20, 255], strides = [1, 1]} : vector<20x256xf32> to vector<20x255xf32>
    %269 = vector.extract_strided_slice %237 {offsets = [0, 255], sizes = [20, 1], strides = [1, 1]} : vector<20x256xf32> to vector<20x1xf32>
    %270 = tpu.concatenate %268, %269 in 1 : vector<20x255xf32>, vector<20x1xf32> -> vector<20x256xf32>
    %271 = vector.shape_cast %20 : vector<1x256xi1> to vector<1x256xi1>
    %272 = vector.broadcast %271 : vector<1x256xi1> to vector<20x256xi1>
    %273 = arith.select %272, %237, %270 : vector<20x256xi1>, vector<20x256xf32>
    %274 = tpu.concatenate %243, %234, %249, %255, %231, %261, %267, %237, %273 in 0 : vector<20x256xf32>, vector<20x256xf32>, vector<20x256xf32>, vector<20x256xf32>, vector<20x256xf32>, vector<20x256xf32>, vector<20x256xf32>, vector<20x256xf32>, vector<20x256xf32> -> vector<180x256xf32>
    %c0_48 = arith.constant 0 : index
    %c0_49 = arith.constant 0 : index
    %275 = vector.load %arg5[%c0_48, %c0_49] : memref<4x180xf32, #tpu.memory_space<vmem>>, vector<4x180xf32>
    %cst_50 = arith.constant dense<0.000000e+00> : vector<4x256xf32>
    %276 = tpu.matmul %275, %274, %cst_50 {dimension_numbers = #tpu.dot_dimension_numbers<[1], [0], [0], [1], [0, 0, 1, 1], [], []>} : vector<4x180xf32>, vector<180x256xf32>, vector<4x256xf32> -> vector<4x256xf32>
    %cst_51 = arith.constant dense<0.000000e+00> : vector<4xf32>
    %277 = vector.multi_reduction <add>, %276, %cst_51 [1] : vector<4x256xf32> to vector<4xf32>
    %278 = vector.shape_cast %277 : vector<4xf32> to vector<4x1xf32>
    %279 = arith.mulf %276, %276 : vector<4x256xf32>
    %cst_52 = arith.constant dense<0.000000e+00> : vector<4xf32>
    %280 = vector.multi_reduction <add>, %279, %cst_52 [1] : vector<4x256xf32> to vector<4xf32>
    %281 = vector.shape_cast %280 : vector<4xf32> to vector<4x1xf32>
    %cst_53 = arith.constant 3.906250e-03 : f32
    %282 = vector.broadcast %cst_53 : f32 to vector<4x1xf32>
    %283 = arith.mulf %278, %282 : vector<4x1xf32>
    %cst_54 = arith.constant 3.906250e-03 : f32
    %284 = vector.broadcast %cst_54 : f32 to vector<4x1xf32>
    %285 = arith.mulf %281, %284 : vector<4x1xf32>
    %286 = arith.mulf %283, %283 : vector<4x1xf32>
    %287 = arith.subf %285, %286 : vector<4x1xf32>
    %cst_55 = arith.constant 0.000000e+00 : f32
    %288 = vector.broadcast %cst_55 : f32 to vector<4x1xf32>
    %289 = arith.maximumf %287, %288 : vector<4x1xf32>
    %290 = vector.broadcast %283 : vector<4x1xf32> to vector<4x256xf32>
    %291 = arith.subf %276, %290 : vector<4x256xf32>
    %cst_56 = arith.constant 9.99999974E-6 : f32
    %292 = vector.broadcast %cst_56 : f32 to vector<4x1xf32>
    %293 = arith.addf %289, %292 : vector<4x1xf32>
    %294 = math.rsqrt %293 : vector<4x1xf32>
    %295 = vector.broadcast %294 : vector<4x1xf32> to vector<4x256xf32>
    %296 = arith.mulf %291, %295 : vector<4x256xf32>
    %cst_57 = arith.constant 0.000000e+00 : f32
    %297 = vector.broadcast %cst_57 : f32 to vector<4x256xf32>
    %298 = arith.maximumf %296, %297 : vector<4x256xf32>
    %c20 = arith.constant 20 : index
    %c0_58 = arith.constant 0 : index
    %299 = vector.load %arg8[%c20, %c0_58] : memref<24x256xf32, #tpu.memory_space<vmem>>, vector<4x256xf32>
    tpu.vector_store %arg8[%c20, %c0_58], %298 {strides = array<i32>} : memref<24x256xf32, #tpu.memory_space<vmem>>, vector<4x256xf32>,
    %c0_59 = arith.constant 0 : index
    %c0_60 = arith.constant 0 : index
    %300 = vector.load %arg6[%c0_59, %c0_60] : memref<8x24xf32, #tpu.memory_space<vmem>>, vector<8x24xf32>
    %c0_61 = arith.constant 0 : index
    %c0_62 = arith.constant 0 : index
    %301 = vector.load %arg8[%c0_61, %c0_62] : memref<24x256xf32, #tpu.memory_space<vmem>>, vector<24x256xf32>
    %cst_63 = arith.constant dense<0.000000e+00> : vector<8x256xf32>
    %302 = tpu.matmul %300, %301, %cst_63 {dimension_numbers = #tpu.dot_dimension_numbers<[1], [0], [0], [1], [0, 0, 1, 1], [], []>} : vector<8x24xf32>, vector<24x256xf32>, vector<8x256xf32> -> vector<8x256xf32>
    %cst_64 = arith.constant dense<0.000000e+00> : vector<8xf32>
    %303 = vector.multi_reduction <add>, %302, %cst_64 [1] : vector<8x256xf32> to vector<8xf32>
    %304 = vector.shape_cast %303 : vector<8xf32> to vector<8x1xf32>
    %305 = arith.mulf %302, %302 : vector<8x256xf32>
    %cst_65 = arith.constant dense<0.000000e+00> : vector<8xf32>
    %306 = vector.multi_reduction <add>, %305, %cst_65 [1] : vector<8x256xf32> to vector<8xf32>
    %307 = vector.shape_cast %306 : vector<8xf32> to vector<8x1xf32>
    %cst_66 = arith.constant 3.906250e-03 : f32
    %308 = vector.broadcast %cst_66 : f32 to vector<8x1xf32>
    %309 = arith.mulf %304, %308 : vector<8x1xf32>
    %cst_67 = arith.constant 3.906250e-03 : f32
    %310 = vector.broadcast %cst_67 : f32 to vector<8x1xf32>
    %311 = arith.mulf %307, %310 : vector<8x1xf32>
    %312 = arith.mulf %309, %309 : vector<8x1xf32>
    %313 = arith.subf %311, %312 : vector<8x1xf32>
    %cst_68 = arith.constant 0.000000e+00 : f32
    %314 = vector.broadcast %cst_68 : f32 to vector<8x1xf32>
    %315 = arith.maximumf %313, %314 : vector<8x1xf32>
    %316 = vector.broadcast %309 : vector<8x1xf32> to vector<8x256xf32>
    %317 = arith.subf %302, %316 : vector<8x256xf32>
    %cst_69 = arith.constant 9.99999974E-6 : f32
    %318 = vector.broadcast %cst_69 : f32 to vector<8x1xf32>
    %319 = arith.addf %315, %318 : vector<8x1xf32>
    %320 = math.rsqrt %319 : vector<8x1xf32>
    %321 = vector.broadcast %320 : vector<8x1xf32> to vector<8x256xf32>
    %322 = arith.mulf %317, %321 : vector<8x256xf32>
    %cst_70 = arith.constant 0.000000e+00 : f32
    %323 = vector.broadcast %cst_70 : f32 to vector<8x256xf32>
    %324 = arith.maximumf %322, %323 : vector<8x256xf32>
    %325 = arith.addf %22, %324 : vector<8x256xf32>
    %c0_71 = arith.constant 0 : index
    %c0_72 = arith.constant 0 : index
    %c0_73 = arith.constant 0 : index
    %326 = vector.load %arg7[%c0_71, %c0_72, %c0_73] : memref<1x8x256xf32, #tpu.memory_space<vmem>>, vector<1x8x256xf32>
    %327 = vector.shape_cast %326 : vector<1x8x256xf32> to vector<8x256xf32>
    %328 = vector.shape_cast %325 : vector<8x256xf32> to vector<1x8x256xf32>
    tpu.vector_store %arg7[%c0_71, %c0_72, %c0_73], %328 {strides = array<i32>} : memref<1x8x256xf32, #tpu.memory_space<vmem>>, vector<1x8x256xf32>,
    return
  }
  func.func @transform_0(%arg0: i32) -> (i32, i32, i32) {
    %c0_i32 = arith.constant 0 : i32
    %c0_i32_0 = arith.constant 0 : i32
    %c0_i32_1 = arith.constant 0 : i32
    return %arg0, %c0_i32, %c0_i32_0 : i32, i32, i32
  }
  func.func @transform_1(%arg0: i32) -> (i32, i32) {
    %c0_i32 = arith.constant 0 : i32
    %c0_i32_0 = arith.constant 0 : i32
    %c0_i32_1 = arith.constant 0 : i32
    return %c0_i32, %c0_i32_0 : i32, i32
  }
  func.func @transform_2(%arg0: i32) -> (i32, i32) {
    %c0_i32 = arith.constant 0 : i32
    %c0_i32_0 = arith.constant 0 : i32
    %c0_i32_1 = arith.constant 0 : i32
    return %c0_i32, %c0_i32_0 : i32, i32
  }
  func.func @transform_3(%arg0: i32) -> (i32, i32) {
    %c0_i32 = arith.constant 0 : i32
    %c0_i32_0 = arith.constant 0 : i32
    %c0_i32_1 = arith.constant 0 : i32
    return %c0_i32, %c0_i32_0 : i32, i32
  }
  func.func @transform_4(%arg0: i32) -> (i32, i32) {
    %c0_i32 = arith.constant 0 : i32
    %c0_i32_0 = arith.constant 0 : i32
    %c0_i32_1 = arith.constant 0 : i32
    return %c0_i32, %c0_i32_0 : i32, i32
  }
  func.func @transform_5(%arg0: i32) -> (i32, i32) {
    %c0_i32 = arith.constant 0 : i32
    %c0_i32_0 = arith.constant 0 : i32
    %c0_i32_1 = arith.constant 0 : i32
    return %c0_i32, %c0_i32_0 : i32, i32
  }
  func.func @transform_6(%arg0: i32) -> (i32, i32, i32) {
    %c0_i32 = arith.constant 0 : i32
    %c0_i32_0 = arith.constant 0 : i32
    %c0_i32_1 = arith.constant 0 : i32
    return %arg0, %c0_i32, %c0_i32_0 : i32, i32, i32
  }
}

</mosaic_0001>

<llo_original>
// kernel: residual_dense_block_2d.1
$region0: #{residual_dense_block_2d.1}
  #allocation0 [shape = 'u32[]', space=smem, size = 0x4, offset = 0x4, fixed_abs, tag = 'smem constant byte address 0x4 - core index']
  #allocation1 [shape = 'u32[144,128]{1,0:T(1,128)}', space=vmem, size = 0x12000, scoped, tag = 'internal scratch']
  #allocation2 [shape = 'f32[24,256]{1,0:T(8,128)}', space=vmem, size = 0x6000, scoped, tag = 'scratch operand']
  %s0 = inlined_call_operand.vmem [shape: f32[2,8,256], index: 0, kind: input, shape index: {}]
  %s1 = inlined_call_operand.vmem [shape: f32[4,72], index: 1, kind: input, shape index: {}]
  %s2 = inlined_call_operand.vmem [shape: f32[4,108], index: 2, kind: input, shape index: {}]
  %s3 = inlined_call_operand.vmem [shape: f32[4,144], index: 3, kind: input, shape index: {}]
  %s4 = inlined_call_operand.vmem [shape: f32[4,180], index: 4, kind: input, shape index: {}]
  %s5 = inlined_call_operand.vmem [shape: f32[8,24], index: 5, kind: input, shape index: {}]
  %s6 = inlined_call_operand.vmem [shape: f32[2,8,256], index: 6, kind: output, shape index: {}]
  %s7 = sld [smem:[#allocation0]]
  $region57: #{residual_dense_block_2d.1} parent=0
    _
  %s9 = ssub.s32 1, %s7
  %s10 = scalar_select 0, %s9, %s7
  loop: start=0, step=1, limit=4
  $region2: #{residual_dense_block_2d.1} parent=0 // loop_pre_header
    _
  $region3: #{residual_dense_block_2d.1} parent=0 // loop_header
    %s12 = sphi 0, %s16
    %p13 = scmp.ge.s32.totalorder %s12, 4
    %s22 = sphi 0, %s24
    %s25 = sphi 0, %s22
    %s26 = sphi 0, %s25
    %s42 = sphi 0, %s26
    %s46 = sphi 0, %s46
    %s48 = sphi 0, %s46
    %s49 = sphi 0, %s48
    %s63 = sphi 0, %s49
    %s67 = sphi 0, %s67
    %s69 = sphi 0, %s67
    %s70 = sphi 0, %s69
    %s84 = sphi 0, %s70
    %s88 = sphi 0, %s88
    %s90 = sphi 0, %s88
    %s91 = sphi 0, %s90
    %s105 = sphi 0, %s91
    %s109 = sphi 0, %s109
    %s111 = sphi 0, %s109
    %s112 = sphi 0, %s111
    %s126 = sphi 0, %s112
    %s130 = sphi 0, %s130
    %s132 = sphi 0, %s130
    %s133 = sphi 0, %s132
    %s147 = sphi 0, %s133
    %s153 = sphi 0, %s155
    %s156 = sphi 0, %s153
    %s157 = sphi 0, %s156
    %s173 = sphi 0, %s157
  $region4: #{residual_dense_block_2d.1} parent=0 // loop_header_branch
    %15 = sbr.rel (%p13) target = $region8
  $region5: #{residual_dense_block_2d.1} parent=0 // loop_body
    %s17 = ssub.s32 %s12, 1
    %s18 = ssub.s32 %s12, 2
    %s19 = sadd.s32 %s12, 1
    %s20 = ssub.s32 %s12, %s19
    %p21 = scmp.eq.s32.totalorder %s20, 0
    %s23 = sadd.s32 %s22, 1
    %s24 = scalar_select %p21, %s22, %s23
    %p27 = pneg %p21
    %p28 = scmp.eq.s32.totalorder %s12, 1
    %p29 = por %p27, %p28
    %p30 = scmp.ne.s32.totalorder %s22, %s25
    %p31 = scmp.eq.s32.totalorder %s12, 0
    %p32 = por %p30, %p31
    %p33 = scmp.ne.s32.totalorder %s22, %s25
    %p34 = scmp.eq.s32.totalorder %s17, 1
    %p35 = por %p33, %p34
    %p36 = scmp.ne.s32.totalorder %s25, %s26
    %p37 = scmp.eq.s32.totalorder %s17, 0
    %p38 = por %p36, %p37
    %p39 = scmp.ne.s32.totalorder %s25, %s26
    %p40 = scmp.eq.s32.totalorder %s18, 1
    %p41 = por %p39, %p40
    %p43 = scmp.ne.s32.totalorder %s26, %s42
    %p44 = scmp.eq.s32.totalorder %s18, 0
    %p45 = por %p43, %p44
    %s47 = sadd.s32 %s46, 1
    %p50 = scmp.eq.s32.totalorder %s12, 1
    %p51 = scmp.ne.s32.totalorder %s46, %s48
    %p52 = scmp.eq.s32.totalorder %s12, 0
    %p53 = por %p51, %p52
    %p54 = scmp.ne.s32.totalorder %s46, %s48
    %p55 = scmp.eq.s32.totalorder %s17, 1
    %p56 = por %p54, %p55
    %p57 = scmp.ne.s32.totalorder %s48, %s49
    %p58 = scmp.eq.s32.totalorder %s17, 0
    %p59 = por %p57, %p58
    %p60 = scmp.ne.s32.totalorder %s48, %s49
    %p61 = scmp.eq.s32.totalorder %s18, 1
    %p62 = por %p60, %p61
    %p64 = scmp.ne.s32.totalorder %s49, %s63
    %p65 = scmp.eq.s32.totalorder %s18, 0
    %p66 = por %p64, %p65
    %s68 = sadd.s32 %s67, 1
    %p71 = scmp.eq.s32.totalorder %s12, 1
    %p72 = scmp.ne.s32.totalorder %s67, %s69
    %p73 = scmp.eq.s32.totalorder %s12, 0
    %p74 = por %p72, %p73
    %p75 = scmp.ne.s32.totalorder %s67, %s69
    %p76 = scmp.eq.s32.totalorder %s17, 1
    %p77 = por %p75, %p76
    %p78 = scmp.ne.s32.totalorder %s69, %s70
    %p79 = scmp.eq.s32.totalorder %s17, 0
    %p80 = por %p78, %p79
    %p81 = scmp.ne.s32.totalorder %s69, %s70
    %p82 = scmp.eq.s32.totalorder %s18, 1
    %p83 = por %p81, %p82
    %p85 = scmp.ne.s32.totalorder %s70, %s84
    %p86 = scmp.eq.s32.totalorder %s18, 0
    %p87 = por %p85, %p86
    %s89 = sadd.s32 %s88, 1
    %p92 = scmp.eq.s32.totalorder %s12, 1
    %p93 = scmp.ne.s32.totalorder %s88, %s90
    %p94 = scmp.eq.s32.totalorder %s12, 0
    %p95 = por %p93, %p94
    %p96 = scmp.ne.s32.totalorder %s88, %s90
    %p97 = scmp.eq.s32.totalorder %s17, 1
    %p98 = por %p96, %p97
    %p99 = scmp.ne.s32.totalorder %s90, %s91
    %p100 = scmp.eq.s32.totalorder %s17, 0
    %p101 = por %p99, %p100
    %p102 = scmp.ne.s32.totalorder %s90, %s91
    %p103 = scmp.eq.s32.totalorder %s18, 1
    %p104 = por %p102, %p103
    %p106 = scmp.ne.s32.totalorder %s91, %s105
    %p107 = scmp.eq.s32.totalorder %s18, 0
    %p108 = por %p106, %p107
    %s110 = sadd.s32 %s109, 1
    %p113 = scmp.eq.s32.totalorder %s12, 1
    %p114 = scmp.ne.s32.totalorder %s109, %s111
    %p115 = scmp.eq.s32.totalorder %s12, 0
    %p116 = por %p114, %p115
    %p117 = scmp.ne.s32.totalorder %s109, %s111
    %p118 = scmp.eq.s32.totalorder %s17, 1
    %p119 = por %p117, %p118
    %p120 = scmp.ne.s32.totalorder %s111, %s112
    %p121 = scmp.eq.s32.totalorder %s17, 0
    %p122 = por %p120, %p121
    %p123 = scmp.ne.s32.totalorder %s111, %s112
    %p124 = scmp.eq.s32.totalorder %s18, 1
    %p125 = por %p123, %p124
    %p127 = scmp.ne.s32.totalorder %s112, %s126
    %p128 = scmp.eq.s32.totalorder %s18, 0
    %p129 = por %p127, %p128
    %s131 = sadd.s32 %s130, 1
    %p134 = scmp.eq.s32.totalorder %s12, 1
    %p135 = scmp.ne.s32.totalorder %s130, %s132
    %p136 = scmp.eq.s32.totalorder %s12, 0
    %p137 = por %p135, %p136
    %p138 = scmp.ne.s32.totalorder %s130, %s132
    %p139 = scmp.eq.s32.totalorder %s17, 1
    %p140 = por %p138, %p139
    %p141 = scmp.ne.s32.totalorder %s132, %s133
    %p142 = scmp.eq.s32.totalorder %s17, 0
    %p143 = por %p141, %p142
    %p144 = scmp.ne.s32.totalorder %s132, %s133
    %p145 = scmp.eq.s32.totalorder %s18, 1
    %p146 = por %p144, %p145
    %p148 = scmp.ne.s32.totalorder %s133, %s147
    %p149 = scmp.eq.s32.totalorder %s18, 0
    %p150 = por %p148, %p149
    %s151 = ssub.s32 %s12, %s19
    %p152 = scmp.eq.s32.totalorder %s151, 0
    %s154 = sadd.s32 %s153, 1
    %s155 = scalar_select %p152, %s153, %s154
    %p158 = pneg %p152
    %p159 = scmp.eq.s32.totalorder %s12, 1
    %p160 = por %p158, %p159
    %p161 = scmp.ne.s32.totalorder %s153, %s156
    %p162 = scmp.eq.s32.totalorder %s12, 0
    %p163 = por %p161, %p162
    %p164 = scmp.ne.s32.totalorder %s153, %s156
    %p165 = scmp.eq.s32.totalorder %s17, 1
    %p166 = por %p164, %p165
    %p167 = scmp.ne.s32.totalorder %s156, %s157
    %p168 = scmp.eq.s32.totalorder %s17, 0
    %p169 = por %p167, %p168
    %p170 = scmp.ne.s32.totalorder %s156, %s157
    %p171 = scmp.eq.s32.totalorder %s18, 1
    %p172 = por %p170, %p171
    %p174 = scmp.ne.s32.totalorder %s157, %s173
    %p175 = scmp.eq.s32.totalorder %s18, 0
    %p176 = por %p174, %p175
    %p177 = scmp.le.s32.totalorder 1, %s12
    %p178 = scmp.lt.s32.totalorder %s12, 3
    %p179 = pnand %p177, %p178
    %p180 = pneg %p179
    // Predicated region
    $region9: #{residual_dense_block_2d.1} parent=5 // pred_check
      _
    $region10: #{residual_dense_block_2d.1} parent=5 // pred_check_branch
      %182 = sbr.rel (%p179) target = $region12
    $region11: #{residual_dense_block_2d.1} parent=5 // pred_region
      %s183 = ssub.s32 %s12, 1
      // Predicated region
      $region13: #{residual_dense_block_2d.1} parent=11 // pred_check
        %p184 = pneg %p59
      $region14: #{residual_dense_block_2d.1} parent=11 // pred_check_branch
        %186 = sbr.rel (%p184) target = $region16
      $region15: #{residual_dense_block_2d.1} parent=11 // pred_region
        _
      $region16: #{residual_dense_block_2d.1} parent=11 // pred_fallthru
        _
      // Predicated region
      $region17: #{residual_dense_block_2d.1} parent=11 // pred_check
        %p187 = pneg %p80
      $region18: #{residual_dense_block_2d.1} parent=11 // pred_check_branch
        %189 = sbr.rel (%p187) target = $region20
      $region19: #{residual_dense_block_2d.1} parent=11 // pred_region
        _
      $region20: #{residual_dense_block_2d.1} parent=11 // pred_fallthru
        _
      // Predicated region
      $region21: #{residual_dense_block_2d.1} parent=11 // pred_check
        %p190 = pneg %p101
      $region22: #{residual_dense_block_2d.1} parent=11 // pred_check_branch
        %192 = sbr.rel (%p190) target = $region24
      $region23: #{residual_dense_block_2d.1} parent=11 // pred_region
        _
      $region24: #{residual_dense_block_2d.1} parent=11 // pred_fallthru
        _
      // Predicated region
      $region25: #{residual_dense_block_2d.1} parent=11 // pred_check
        %p193 = pneg %p122
      $region26: #{residual_dense_block_2d.1} parent=11 // pred_check_branch
        %195 = sbr.rel (%p193) target = $region28
      $region27: #{residual_dense_block_2d.1} parent=11 // pred_region
        _
      $region28: #{residual_dense_block_2d.1} parent=11 // pred_fallthru
        _
      // Predicated region
      $region29: #{residual_dense_block_2d.1} parent=11 // pred_check
        %p196 = pneg %p143
      $region30: #{residual_dense_block_2d.1} parent=11 // pred_check_branch
        %198 = sbr.rel (%p196) target = $region32
      $region31: #{residual_dense_block_2d.1} parent=11 // pred_region
        _
      $region32: #{residual_dense_block_2d.1} parent=11 // pred_fallthru
        _
    $region12: #{residual_dense_block_2d.1} parent=5 // pred_fallthru
      _
    %p199 = scmp.lt.s32.totalorder %s12, 2
    // Predicated region
    $region33: #{residual_dense_block_2d.1} parent=5 // pred_check
      %p200 = pneg %p199
    $region34: #{residual_dense_block_2d.1} parent=5 // pred_check_branch
      %202 = sbr.rel (%p200) target = $region36
    $region35: #{residual_dense_block_2d.1} parent=5 // pred_region
      // Predicated region
      $region37: #{residual_dense_block_2d.1} parent=35 // pred_check
        %p203 = pneg %p32
      $region38: #{residual_dense_block_2d.1} parent=35 // pred_check_branch
        %205 = sbr.rel (%p203) target = $region40
      $region39: #{residual_dense_block_2d.1} parent=35 // pred_region
        %p206 = scmp.lt.s32.totalorder %s12, 1
        %s207 = scalar_select %p206, %s12, 1
        %s208 = smul.addr %s207, 2
        %s209 = smul.addr %s208, 8
        %s210 = scalar_lea.vmem %s0, %s209
      $region40: #{residual_dense_block_2d.1} parent=35 // pred_fallthru
        _
    $region36: #{residual_dense_block_2d.1} parent=5 // pred_fallthru
      _
    %p211 = scmp.le.s32.totalorder 1, %s12
    %p212 = scmp.lt.s32.totalorder %s12, 3
    %p213 = pnand %p211, %p212
    %p214 = pneg %p213
    // Predicated region
    $region41: #{residual_dense_block_2d.1} parent=5 // pred_check
      _
    $region42: #{residual_dense_block_2d.1} parent=5 // pred_check_branch
      %216 = sbr.rel (%p213) target = $region44
    $region43: #{residual_dense_block_2d.1} parent=5 // pred_region
      %s217 = ssub.s32 %s12, 1
      %p218 = scmp.lt.s32.totalorder %s17, 1
      %s219 = scalar_select %p218, %s17, 1
      %s220 = smul.addr %s219, 2
      %s221 = smul.addr %s220, 8
      %s222 = scalar_lea.vmem %s0, %s221
      %p223 = pneg %p38
      %p224 = pneg %p35
      %p225 = pneg %p59
      %p226 = pneg %p56
      %p227 = pneg %p80
      %p228 = pneg %p77
      %p229 = pneg %p101
      %p230 = pneg %p98
      %p231 = pneg %p122
      %p232 = pneg %p119
      %p233 = pneg %p143
      %p234 = pneg %p140
      %p235 = pneg %p169
      %p236 = pneg %p166
      %p237 = scmp.lt.s32.totalorder %s17, 1
      %s238 = scalar_select %p237, %s17, 1
      %s239 = smul.addr %s238, 2
      %s240 = smul.addr %s239, 8
      %s241 = scalar_lea.vmem %s6, %s240
      %p242 = scmp.lt.s32.totalorder %s17, 1
      %s243 = scalar_select %p242, %s17, 1
      %s244 = smul.addr %s243, 2
      %s245 = smul.addr %s244, 8
      %s246 = scalar_lea.vmem %s0, %s245
      %p247 = scmp.lt.s32.totalorder %s17, 1
      %s248 = scalar_select %p247, %s17, 1
      %s249 = smul.addr %s248, 2
      %s250 = smul.addr %s249, 8
      %s251 = scalar_lea.vmem %s6, %s250
      %v252 = vlaneseq
      %v253 = vand.u32 %v252, 127
      %v254 = vadd.s32 %v253, 128
      %vm255 = vcmp.lt.s32.totalorder %v253, 0
      %v256 = vsub.s32 0, %v253
      %v257 = vsel %vm255, %v256, %v253
      %v258 = vshrl.u32 %v257, 4
      %v259 = vand.u32 %v257, 15
      %v260 = vsub.s32 0, %v259
      %v261 = vsel %vm255, %v260, %v259
      %vm262 = vcmp.lt.s32.totalorder %v254, 0
      %v263 = vsub.s32 0, %v254
      %v264 = vsel %vm262, %v263, %v254
      %v265 = vshrl.u32 %v264, 4
      %v266 = vand.u32 %v264, 15
      %v267 = vsub.s32 0, %v266
      %v268 = vsel %vm262, %v267, %v266
      %vm269 = vcmp.ne.s32.totalorder %v261, 0
      %vm270 = vcmp.ne.s32.totalorder %v268, 0
      %vm271 = vcmp.lt.s32.totalorder %v261, 0
      %vm272 = vcmp.lt.s32.totalorder %v268, 0
      %vm273 = vmand %vm271, %vm269
      %vm274 = vmand %vm272, %vm270
      %v275 = vadd.s32 %v261, 16
      %v276 = vadd.s32 %v268, 16
      %v277 = vsel %vm273, %v275, %v261
      %v278 = vsel %vm274, %v276, %v268
      %vm279 = vcmp.eq.s32.totalorder %v277, 0
      %vm280 = vcmp.eq.s32.totalorder %v278, 0
      %vm281 = vcmp.eq.s32.totalorder %v277, 15
      %vm282 = vcmp.eq.s32.totalorder %v278, 15
      %v283 = vld [vmem:[%s246] sm:$0xff]
      %v284 = vld [vmem:[%s246 + $0x8] sm:$0xff]
      %285 = vst [vmem:[#allocation2] sm:$0xff] %v283
      %286 = vst [vmem:[#allocation2 + $0x8] sm:$0xff] %v284
      %v287 = vld [vmem:[#allocation2] sm:$0xff]
      %v288 = vld [vmem:[#allocation2 + $0x8] sm:$0xff]
      %291 = vrot.lane.b32.xlu0 %v287, 16
      %v292 = vpop.permute.xlu0 %291
      %293 = vrot.lane.b32.xlu0 %v288, 16
      %v294 = vpop.permute.xlu0 %293
      %vm295 = vcmask 130048
      %v296 = vsel %vm295, %v292, %v294
      %v299 = vsel %vm295, %v287, %v292
      %300 = vrot.lane.b32.xlu0 %v287, 112
      %v301 = vpop.permute.xlu0 %300
      %302 = vrot.lane.b32.xlu0 %v288, 112
      %v303 = vpop.permute.xlu0 %302
      %vm304 = vcmask 916480
      %v305 = vsel %vm304, %v301, %v303
      %v308 = vsel %vm304, %v303, %v288
      %310 = vrot.lane.b32.xlu0 %v299, 1
      %v311 = vpop.permute.xlu0 %310
      %312 = vrot.lane.b32.xlu0 %v296, 1
      %v313 = vpop.permute.xlu0 %312
      %vm314 = vcmask 7168
      %v315 = vsel %vm314, %v311, %v313
      %v318 = vsel %vm314, %v299, %v311
      %v319 = vsel %vm279, 1, 0
      %v320 = vsel %vm280, 1, 0
      %vm321 = vcmp.eq.s32.totalorder %v319, 1
      %vm322 = vcmp.eq.s32.totalorder %v320, 1
      %v323 = vsel %vm321, %v299, %v318
      %v324 = vsel %vm322, %v296, %v315
      %325 = vrot.lane.b32.xlu0 %v299, 127
      %v326 = vpop.permute.xlu0 %325
      %327 = vrot.lane.b32.xlu0 %v296, 127
      %v328 = vpop.permute.xlu0 %327
      %vm329 = vcmask 1039360
      %v330 = vsel %vm329, %v326, %v328
      %v333 = vsel %vm329, %v328, %v296
      %v334 = vsel %vm281, 1, 0
      %v335 = vsel %vm282, 1, 0
      %vm336 = vcmp.eq.s32.totalorder %v334, 1
      %vm337 = vcmp.eq.s32.totalorder %v335, 1
      %v338 = vsel %vm336, %v299, %v330
      %v339 = vsel %vm337, %v296, %v333
      %340 = vrot.lane.b32.xlu0 %v287, 1
      %v341 = vpop.permute.xlu0 %340
      %342 = vrot.lane.b32.xlu0 %v288, 1
      %v343 = vpop.permute.xlu0 %342
      %v344 = vsel %vm314, %v341, %v343
      %v347 = vsel %vm314, %v287, %v341
      %v348 = vsel %vm321, %v287, %v347
      %v349 = vsel %vm322, %v288, %v344
      %350 = vrot.lane.b32.xlu0 %v287, 127
      %v351 = vpop.permute.xlu0 %350
      %352 = vrot.lane.b32.xlu0 %v288, 127
      %v353 = vpop.permute.xlu0 %352
      %v354 = vsel %vm329, %v351, %v353
      %v357 = vsel %vm329, %v353, %v288
      %v358 = vsel %vm336, %v287, %v354
      %v359 = vsel %vm337, %v288, %v357
      %361 = vrot.lane.b32.xlu0 %v305, 1
      %v362 = vpop.permute.xlu0 %361
      %363 = vrot.lane.b32.xlu0 %v308, 1
      %v364 = vpop.permute.xlu0 %363
      %v365 = vsel %vm314, %v362, %v364
      %v368 = vsel %vm314, %v305, %v362
      %v369 = vsel %vm321, %v305, %v368
      %v370 = vsel %vm322, %v308, %v365
      %371 = vrot.lane.b32.xlu0 %v305, 127
      %v372 = vpop.permute.xlu0 %371
      %373 = vrot.lane.b32.xlu0 %v308, 127
      %v374 = vpop.permute.xlu0 %373
      %v375 = vsel %vm329, %v372, %v374
      %v378 = vsel %vm329, %v374, %v308
      %v379 = vsel %vm336, %v305, %v375
      %v380 = vsel %vm337, %v308, %v378
      %v381 = vld [vmem:[%s1] sm:$0xf]
      %vm382 = vcmask 588800
      %v384 = vsel %vm382, %v381, 0
      %386 = vmatprep.subr.mxu0 %v324
      %387 = vmatpush1.msra.mxu0 %v323
      %388 = vmatprep.subr.mxu0 %v296
      %389 = vmatpush1.msra.mxu0 %v299
      %390 = vmatprep.subr.mxu0 %v339
      %391 = vmatpush1.msra.mxu0 %v338
      %392 = vmatprep.subr.mxu0 %v349
      %393 = vmatpush1.msra.mxu0 %v348
      %394 = vmatprep.subr.mxu0 %v288
      %395 = vmatpush1.msra.mxu0 %v287
      %396 = vmatprep.subr.mxu0 %v359
      %397 = vmatpush1.msra.mxu0 %v358
      %398 = vmatprep.subr.mxu0 %v370
      %399 = vmatpush1.msra.mxu0 %v369
      %400 = vmatprep.subr.mxu0 %v308
      %401 = vmatpush1.msra.mxu0 %v305
      %402 = vmatprep.subr.mxu0 %v380
      %403 = vmatpush1.msra.mxu0 %v379
      %404 = vmatprep.subr.mxu0 0.0
      %405 = vmatpush1.msra.mxu0 0.0
      %406 = vmatprep.subr.mxu0 0.0
      %407 = vmatpush1.msra.mxu0 0.0
      %408 = vmatprep.subr.mxu0 0.0
      %409 = vmatpush1.msra.mxu0 0.0
      %410 = vmatprep.subr.mxu0 0.0
      %411 = vmatpush1.msra.mxu0 0.0
      %412 = vmatprep.subr.mxu0 0.0
      %413 = vmatpush1.msra.mxu0 0.0
      %414 = vmatprep.subr.mxu0 0.0
      %415 = vmatpush1.msra.mxu0 0.0
      %416 = vmatprep.subr.mxu0 0.0
      %417 = vmatpush1.msra.mxu0 0.0
      %418 = vmatprep.subr.mxu0 0.0
      %419 = vmatpush1.msra.mxu0 0.0
      %420 = vmatprep.subr.mxu0 0.0
      %421 = vmatpush1.msra.mxu0 0.0
      %422 = vmatprep.subr.mxu0 0.0
      %423 = vmatpush1.msra.mxu0 0.0
      %424 = vmatprep.subr.mxu0 0.0
      %425 = vmatpush1.msra.mxu0 0.0
      %426 = vmatprep.subr.mxu0 0.0
      %427 = vmatpush1.msra.mxu0 0.0
      %428 = vmatprep.subr.mxu0 0.0
      %429 = vmatpush1.msra.mxu0 0.0
      %430 = vmatprep.subr.mxu0 0.0
      %431 = vmatpush1.msra.mxu0 0.0
      %432 = vmatprep.subr.mxu0 0.0
      %433 = vmatpush1.msra.mxu0 0.0
      %434 = vmatprep.subr.mxu0 0.0
      %435 = vmatpush1.msra.mxu0 0.0
      %436 = vmatprep.subr.mxu0 0.0
      %437 = vmatpush1.msra.mxu0 0.0
      %438 = vmatprep.subr.mxu0 0.0
      %439 = vmatpush1.msra.mxu0 0.0
      %440 = vmatprep.subr.mxu0 0.0
      %441 = vmatpush1.msra.mxu0 0.0
      %442 = vmatprep.subr.mxu0 0.0
      %443 = vmatpush1.msra.mxu0 0.0
      %444 = vmatprep.subr.mxu0 0.0
      %445 = vmatpush1.msra.mxu0 0.0
      %446 = vmatprep.subr.mxu0 0.0
      %447 = vmatpush1.msra.mxu0 0.0
      %448 = vmatprep.subr.mxu0 0.0
      %449 = vmatpush1.msra.mxu0 0.0
      %450 = vmatprep.mubr.f32.mxu0 0.0
      %451 = vmatmul.mubr.f32.gmra.mrb[0].mxu0 %v384
      %v452 = vpop.f32.mrb[0].mxu0
      %v453 = vadd.f32 0.0, %v452
      %v454 = vpop.f32.mrb[0].mxu0
      %v455 = vadd.f32 0.0, %v454
      %456 = vdwg.mxu0
      %vm457 = vcmask 1043456
      %v458 = vsel %vm457, %v453, 0.0
      %v459 = vsel %vm457, %v455, 0.0
      %v460 = vadd.f32 %v458, %v459
      %461 = vadd.xlane.f32.xlu0 %v460
      %v462 = vpop.xlane.xlu0 %461
      %v463 = vmul.f32 %v453, %v453
      %v464 = vmul.f32 %v455, %v455
      %v465 = vsel %vm457, %v463, 0.0
      %v466 = vsel %vm457, %v464, 0.0
      %v467 = vadd.f32 %v465, %v466
      %468 = vadd.xlane.f32.xlu0 %v467
      %v469 = vpop.xlane.xlu0 %468
      %v470 = vmul.f32 %v462, 0.00390625
      %v471 = vmul.f32 %v469, 0.00390625
      %v472 = vmul.f32 %v470, %v470
      %v473 = vsub.f32 %v471, %v472
      %v474 = vmax.f32 %v473, 0.0
      %v475 = vsub.f32 %v453, %v470
      %v476 = vsub.f32 %v455, %v470
      %v477 = vadd.f32 %v474, 1e-05
      %v478 = vrsqrt.pop %v477
      %v479 = vmul.f32 %v475, %v478
      %v480 = vmul.f32 %v476, %v478
      %v481 = vmax.f32 %v479, 0.0
      %v482 = vmax.f32 %v480, 0.0
      %483 = vst [vmem:[#allocation2 + $0x10] sm:$0xf] %v481
      %484 = vst [vmem:[#allocation2 + $0x18] sm:$0xf] %v482
      %v485 = vld [vmem:[#allocation2] sm:$0xff]
      %v486 = vld [vmem:[#allocation2 + $0x8] sm:$0xff]
      %v487 = vld [vmem:[#allocation2 + $0x10] sm:$0xf]
      %v488 = vld [vmem:[#allocation2 + $0x18] sm:$0xf]
      %493 = vrot.lane.b32.xlu0 %v485, 16
      %v494 = vpop.permute.xlu0 %493
      %495 = vrot.lane.b32.xlu0 %v486, 16
      %v496 = vpop.permute.xlu0 %495
      %497 = vrot.lane.b32.xlu0 %v487, 16
      %v498 = vpop.permute.xlu0 %497
      %499 = vrot.lane.b32.xlu0 %v488, 16
      %v500 = vpop.permute.xlu0 %499
      %v501 = vsel %vm295, %v494, %v496
      %v502 = vsel %vm295, %v498, %v500
      %v507 = vsel %vm295, %v485, %v494
      %v508 = vsel %vm295, %v487, %v498
      %509 = vrot.lane.b32.xlu0 %v485, 112
      %v510 = vpop.permute.xlu0 %509
      %511 = vrot.lane.b32.xlu0 %v486, 112
      %v512 = vpop.permute.xlu0 %511
      %513 = vrot.lane.b32.xlu0 %v487, 112
      %v514 = vpop.permute.xlu0 %513
      %515 = vrot.lane.b32.xlu0 %v488, 112
      %v516 = vpop.permute.xlu0 %515
      %v517 = vsel %vm304, %v510, %v512
      %v518 = vsel %vm304, %v514, %v516
      %v523 = vsel %vm304, %v512, %v486
      %v524 = vsel %vm304, %v516, %v488
      %527 = vrot.lane.b32.xlu0 %v507, 1
      %v528 = vpop.permute.xlu0 %527
      %529 = vrot.lane.b32.xlu0 %v501, 1
      %v530 = vpop.permute.xlu0 %529
      %531 = vrot.lane.b32.xlu0 %v508, 1
      %v532 = vpop.permute.xlu0 %531
      %533 = vrot.lane.b32.xlu0 %v502, 1
      %v534 = vpop.permute.xlu0 %533
      %v535 = vsel %vm314, %v528, %v530
      %v536 = vsel %vm314, %v532, %v534
      %v541 = vsel %vm314, %v507, %v528
      %v542 = vsel %vm314, %v508, %v532
      %v543 = vsel %vm321, %v507, %v541
      %v544 = vsel %vm322, %v501, %v535
      %v545 = vsel %vm321, %v508, %v542
      %v546 = vsel %vm322, %v502, %v536
      %547 = vrot.lane.b32.xlu0 %v507, 127
      %v548 = vpop.permute.xlu0 %547
      %549 = vrot.lane.b32.xlu0 %v501, 127
      %v550 = vpop.permute.xlu0 %549
      %551 = vrot.lane.b32.xlu0 %v508, 127
      %v552 = vpop.permute.xlu0 %551
      %553 = vrot.lane.b32.xlu0 %v502, 127
      %v554 = vpop.permute.xlu0 %553
      %v555 = vsel %vm329, %v548, %v550
      %v556 = vsel %vm329, %v552, %v554
      %v561 = vsel %vm329, %v550, %v501
      %v562 = vsel %vm329, %v554, %v502
      %v563 = vsel %vm336, %v507, %v555
      %v564 = vsel %vm337, %v501, %v561
      %v565 = vsel %vm336, %v508, %v556
      %v566 = vsel %vm337, %v502, %v562
      %567 = vrot.lane.b32.xlu0 %v485, 1
      %v568 = vpop.permute.xlu0 %567
      %569 = vrot.lane.b32.xlu0 %v486, 1
      %v570 = vpop.permute.xlu0 %569
      %571 = vrot.lane.b32.xlu0 %v487, 1
      %v572 = vpop.permute.xlu0 %571
      %573 = vrot.lane.b32.xlu0 %v488, 1
      %v574 = vpop.permute.xlu0 %573
      %v575 = vsel %vm314, %v568, %v570
      %v576 = vsel %vm314, %v572, %v574
      %v581 = vsel %vm314, %v485, %v568
      %v582 = vsel %vm314, %v487, %v572
      %v583 = vsel %vm321, %v485, %v581
      %v584 = vsel %vm322, %v486, %v575
      %v585 = vsel %vm321, %v487, %v582
      %v586 = vsel %vm322, %v488, %v576
      %587 = vrot.lane.b32.xlu0 %v485, 127
      %v588 = vpop.permute.xlu0 %587
      %589 = vrot.lane.b32.xlu0 %v486, 127
      %v590 = vpop.permute.xlu0 %589
      %591 = vrot.lane.b32.xlu0 %v487, 127
      %v592 = vpop.permute.xlu0 %591
      %593 = vrot.lane.b32.xlu0 %v488, 127
      %v594 = vpop.permute.xlu0 %593
      %v595 = vsel %vm329, %v588, %v590
      %v596 = vsel %vm329, %v592, %v594
      %v601 = vsel %vm329, %v590, %v486
      %v602 = vsel %vm329, %v594, %v488
      %v603 = vsel %vm336, %v485, %v595
      %v604 = vsel %vm337, %v486, %v601
      %v605 = vsel %vm336, %v487, %v596
      %v606 = vsel %vm337, %v488, %v602
      %609 = vrot.lane.b32.xlu0 %v517, 1
      %v610 = vpop.permute.xlu0 %609
      %611 = vrot.lane.b32.xlu0 %v523, 1
      %v612 = vpop.permute.xlu0 %611
      %613 = vrot.lane.b32.xlu0 %v518, 1
      %v614 = vpop.permute.xlu0 %613
      %615 = vrot.lane.b32.xlu0 %v524, 1
      %v616 = vpop.permute.xlu0 %615
      %v617 = vsel %vm314, %v610, %v612
      %v618 = vsel %vm314, %v614, %v616
      %v623 = vsel %vm314, %v517, %v610
      %v624 = vsel %vm314, %v518, %v614
      %v625 = vsel %vm321, %v517, %v623
      %v626 = vsel %vm322, %v523, %v617
      %v627 = vsel %vm321, %v518, %v624
      %v628 = vsel %vm322, %v524, %v618
      %629 = vrot.lane.b32.xlu0 %v517, 127
      %v630 = vpop.permute.xlu0 %629
      %631 = vrot.lane.b32.xlu0 %v523, 127
      %v632 = vpop.permute.xlu0 %631
      %633 = vrot.lane.b32.xlu0 %v518, 127
      %v634 = vpop.permute.xlu0 %633
      %635 = vrot.lane.b32.xlu0 %v524, 127
      %v636 = vpop.permute.xlu0 %635
      %v637 = vsel %vm329, %v630, %v632
      %v638 = vsel %vm329, %v634, %v636
      %v643 = vsel %vm329, %v632, %v523
      %v644 = vsel %vm329, %v636, %v524
      %v645 = vsel %vm336, %v517, %v637
      %v646 = vsel %vm337, %v523, %v643
      %v647 = vsel %vm336, %v518, %v638
      %v648 = vsel %vm337, %v524, %v644
      %v649 = vrot.slane %v507, 4
      %v650 = vrot.slane %v501, 4
      %v651 = vrot.slane %v508, 4
      %v652 = vsel %vm457, %v649, %v651
      %v653 = vrot.slane %v502, 4
      %v654 = vsel %vm457, %v650, %v653
      %v663 = vrot.slane %v583, 4
      %v664 = vrot.slane %v584, 4
      %v665 = vrot.slane %v585, 4
      %v666 = vsel %vm457, %v663, %v665
      %v667 = vrot.slane %v586, 4
      %v668 = vsel %vm457, %v664, %v667
      %v677 = vrot.slane %v603, 4
      %v678 = vrot.slane %v604, 4
      %v679 = vrot.slane %v605, 4
      %v680 = vsel %vm457, %v677, %v679
      %v681 = vrot.slane %v606, 4
      %v682 = vsel %vm457, %v678, %v681
      %v687 = vrot.slane %v517, 4
      %v688 = vrot.slane %v523, 4
      %v689 = vrot.slane %v518, 4
      %v690 = vsel %vm457, %v687, %v689
      %v691 = vrot.slane %v524, 4
      %v692 = vsel %vm457, %v688, %v691
      %v697 = vsel %vm457, %v545, %v649
      %v698 = vsel %vm457, %v546, %v650
      %v699 = vsel %vm457, %v565, %v663
      %v700 = vsel %vm457, %v566, %v664
      %v701 = vsel %vm457, %v487, %v677
      %v702 = vsel %vm457, %v488, %v678
      %v703 = vsel %vm457, %v627, %v687
      %v704 = vsel %vm457, %v628, %v688
      %v705 = vld [vmem:[%s2] sm:$0xf]
      %vm706 = vcmask 883712
      %v708 = vsel %vm706, %v705, 0
      %v711 = vsel %vm457, %v647, 0
      %v714 = vsel %vm457, %v648, 0
      %716 = vmatprep.subr.mxu0 %v544
      %717 = vmatpush1.msra.mxu0 %v543
      %718 = vmatprep.subr.mxu0 %v698
      %719 = vmatpush1.msra.mxu0 %v697
      %720 = vmatprep.subr.mxu0 %v654
      %721 = vmatpush1.msra.mxu0 %v652
      %722 = vmatprep.subr.mxu0 %v564
      %723 = vmatpush1.msra.mxu0 %v563
      %724 = vmatprep.subr.mxu0 %v700
      %725 = vmatpush1.msra.mxu0 %v699
      %726 = vmatprep.subr.mxu0 %v668
      %727 = vmatpush1.msra.mxu0 %v666
      %728 = vmatprep.subr.mxu0 %v486
      %729 = vmatpush1.msra.mxu0 %v485
      %730 = vmatprep.subr.mxu0 %v702
      %731 = vmatpush1.msra.mxu0 %v701
      %732 = vmatprep.subr.mxu0 %v682
      %733 = vmatpush1.msra.mxu0 %v680
      %734 = vmatprep.subr.mxu0 %v626
      %735 = vmatpush1.msra.mxu0 %v625
      %736 = vmatprep.subr.mxu0 %v704
      %737 = vmatpush1.msra.mxu0 %v703
      %738 = vmatprep.subr.mxu0 %v692
      %739 = vmatpush1.msra.mxu0 %v690
      %740 = vmatprep.subr.mxu0 %v646
      %741 = vmatpush1.msra.mxu0 %v645
      %742 = vmatprep.subr.mxu0 %v714
      %743 = vmatpush1.msra.mxu0 %v711
      %744 = vmatprep.subr.mxu0 0.0
      %745 = vmatpush1.msra.mxu0 0.0
      %746 = vmatprep.subr.mxu0 0.0
      %747 = vmatpush1.msra.mxu0 0.0
      %748 = vmatprep.subr.mxu0 0.0
      %749 = vmatpush1.msra.mxu0 0.0
      %750 = vmatprep.subr.mxu0 0.0
      %751 = vmatpush1.msra.mxu0 0.0
      %752 = vmatprep.subr.mxu0 0.0
      %753 = vmatpush1.msra.mxu0 0.0
      %754 = vmatprep.subr.mxu0 0.0
      %755 = vmatpush1.msra.mxu0 0.0
      %756 = vmatprep.subr.mxu0 0.0
      %757 = vmatpush1.msra.mxu0 0.0
      %758 = vmatprep.subr.mxu0 0.0
      %759 = vmatpush1.msra.mxu0 0.0
      %760 = vmatprep.subr.mxu0 0.0
      %761 = vmatpush1.msra.mxu0 0.0
      %762 = vmatprep.subr.mxu0 0.0
      %763 = vmatpush1.msra.mxu0 0.0
      %764 = vmatprep.subr.mxu0 0.0
      %765 = vmatpush1.msra.mxu0 0.0
      %766 = vmatprep.subr.mxu0 0.0
      %767 = vmatpush1.msra.mxu0 0.0
      %768 = vmatprep.subr.mxu0 0.0
      %769 = vmatpush1.msra.mxu0 0.0
      %770 = vmatprep.subr.mxu0 0.0
      %771 = vmatpush1.msra.mxu0 0.0
      %772 = vmatprep.subr.mxu0 0.0
      %773 = vmatpush1.msra.mxu0 0.0
      %774 = vmatprep.subr.mxu0 0.0
      %775 = vmatpush1.msra.mxu0 0.0
      %776 = vmatprep.subr.mxu0 0.0
      %777 = vmatpush1.msra.mxu0 0.0
      %778 = vmatprep.subr.mxu0 0.0
      %779 = vmatpush1.msra.mxu0 0.0
      %780 = vmatprep.mubr.f32.mxu0 0.0
      %781 = vmatmul.mubr.f32.gmra.mrb[0].mxu0 %v708
      %v782 = vpop.f32.mrb[0].mxu0
      %v783 = vadd.f32 0.0, %v782
      %v784 = vpop.f32.mrb[0].mxu0
      %v785 = vadd.f32 0.0, %v784
      %786 = vdwg.mxu0
      %v787 = vsel %vm457, %v783, 0.0
      %v788 = vsel %vm457, %v785, 0.0
      %v789 = vadd.f32 %v787, %v788
      %790 = vadd.xlane.f32.xlu0 %v789
      %v791 = vpop.xlane.xlu0 %790
      %v792 = vmul.f32 %v783, %v783
      %v793 = vmul.f32 %v785, %v785
      %v794 = vsel %vm457, %v792, 0.0
      %v795 = vsel %vm457, %v793, 0.0
      %v796 = vadd.f32 %v794, %v795
      %797 = vadd.xlane.f32.xlu0 %v796
      %v798 = vpop.xlane.xlu0 %797
      %v799 = vmul.f32 %v791, 0.00390625
      %v800 = vmul.f32 %v798, 0.00390625
      %v801 = vmul.f32 %v799, %v799
      %v802 = vsub.f32 %v800, %v801
      %v803 = vmax.f32 %v802, 0.0
      %v804 = vsub.f32 %v783, %v799
      %v805 = vsub.f32 %v785, %v799
      %v806 = vadd.f32 %v803, 1e-05
      %v807 = vrsqrt.pop %v806
      %v808 = vmul.f32 %v804, %v807
      %v809 = vmul.f32 %v805, %v807
      %v810 = vmax.f32 %v808, 0.0
      %v811 = vmax.f32 %v809, 0.0
      %v814 = vrot.slane %v810, 4
      %v815 = vrot.slane %v811, 4
      %818 = vst [vmem:[#allocation2 + $0x10] sm:$0xf0] %v814
      %819 = vst [vmem:[#allocation2 + $0x18] sm:$0xf0] %v815
      %v820 = vld [vmem:[#allocation2] sm:$0xff]
      %v821 = vld [vmem:[#allocation2 + $0x8] sm:$0xff]
      %v822 = vld [vmem:[#allocation2 + $0x10] sm:$0xff]
      %v823 = vld [vmem:[#allocation2 + $0x18] sm:$0xff]
      %828 = vrot.lane.b32.xlu0 %v820, 16
      %v829 = vpop.permute.xlu0 %828
      %830 = vrot.lane.b32.xlu0 %v821, 16
      %v831 = vpop.permute.xlu0 %830
      %832 = vrot.lane.b32.xlu0 %v822, 16
      %v833 = vpop.permute.xlu0 %832
      %834 = vrot.lane.b32.xlu0 %v823, 16
      %v835 = vpop.permute.xlu0 %834
      %v836 = vsel %vm295, %v829, %v831
      %v837 = vsel %vm295, %v833, %v835
      %v842 = vsel %vm295, %v820, %v829
      %v843 = vsel %vm295, %v822, %v833
      %844 = vrot.lane.b32.xlu0 %v820, 112
      %v845 = vpop.permute.xlu0 %844
      %846 = vrot.lane.b32.xlu0 %v821, 112
      %v847 = vpop.permute.xlu0 %846
      %848 = vrot.lane.b32.xlu0 %v822, 112
      %v849 = vpop.permute.xlu0 %848
      %850 = vrot.lane.b32.xlu0 %v823, 112
      %v851 = vpop.permute.xlu0 %850
      %v852 = vsel %vm304, %v845, %v847
      %v853 = vsel %vm304, %v849, %v851
      %v858 = vsel %vm304, %v847, %v821
      %v859 = vsel %vm304, %v851, %v823
      %862 = vrot.lane.b32.xlu0 %v842, 1
      %v863 = vpop.permute.xlu0 %862
      %864 = vrot.lane.b32.xlu0 %v836, 1
      %v865 = vpop.permute.xlu0 %864
      %866 = vrot.lane.b32.xlu0 %v843, 1
      %v867 = vpop.permute.xlu0 %866
      %868 = vrot.lane.b32.xlu0 %v837, 1
      %v869 = vpop.permute.xlu0 %868
      %v870 = vsel %vm314, %v863, %v865
      %v871 = vsel %vm314, %v867, %v869
      %v876 = vsel %vm314, %v842, %v863
      %v877 = vsel %vm314, %v843, %v867
      %v878 = vsel %vm321, %v842, %v876
      %v879 = vsel %vm322, %v836, %v870
      %v880 = vsel %vm321, %v843, %v877
      %v881 = vsel %vm322, %v837, %v871
      %882 = vrot.lane.b32.xlu0 %v842, 127
      %v883 = vpop.permute.xlu0 %882
      %884 = vrot.lane.b32.xlu0 %v836, 127
      %v885 = vpop.permute.xlu0 %884
      %886 = vrot.lane.b32.xlu0 %v843, 127
      %v887 = vpop.permute.xlu0 %886
      %888 = vrot.lane.b32.xlu0 %v837, 127
      %v889 = vpop.permute.xlu0 %888
      %v890 = vsel %vm329, %v883, %v885
      %v891 = vsel %vm329, %v887, %v889
      %v896 = vsel %vm329, %v885, %v836
      %v897 = vsel %vm329, %v889, %v837
      %v898 = vsel %vm336, %v842, %v890
      %v899 = vsel %vm337, %v836, %v896
      %v900 = vsel %vm336, %v843, %v891
      %v901 = vsel %vm337, %v837, %v897
      %902 = vrot.lane.b32.xlu0 %v820, 1
      %v903 = vpop.permute.xlu0 %902
      %904 = vrot.lane.b32.xlu0 %v821, 1
      %v905 = vpop.permute.xlu0 %904
      %906 = vrot.lane.b32.xlu0 %v822, 1
      %v907 = vpop.permute.xlu0 %906
      %908 = vrot.lane.b32.xlu0 %v823, 1
      %v909 = vpop.permute.xlu0 %908
      %v910 = vsel %vm314, %v903, %v905
      %v911 = vsel %vm314, %v907, %v909
      %v916 = vsel %vm314, %v820, %v903
      %v917 = vsel %vm314, %v822, %v907
      %v918 = vsel %vm321, %v820, %v916
      %v919 = vsel %vm322, %v821, %v910
      %v920 = vsel %vm321, %v822, %v917
      %v921 = vsel %vm322, %v823, %v911
      %922 = vrot.lane.b32.xlu0 %v820, 127
      %v923 = vpop.permute.xlu0 %922
      %924 = vrot.lane.b32.xlu0 %v821, 127
      %v925 = vpop.permute.xlu0 %924
      %926 = vrot.lane.b32.xlu0 %v822, 127
      %v927 = vpop.permute.xlu0 %926
      %928 = vrot.lane.b32.xlu0 %v823, 127
      %v929 = vpop.permute.xlu0 %928
      %v930 = vsel %vm329, %v923, %v925
      %v931 = vsel %vm329, %v927, %v929
      %v936 = vsel %vm329, %v925, %v821
      %v937 = vsel %vm329, %v929, %v823
      %v938 = vsel %vm336, %v820, %v930
      %v939 = vsel %vm337, %v821, %v936
      %v940 = vsel %vm336, %v822, %v931
      %v941 = vsel %vm337, %v823, %v937
      %944 = vrot.lane.b32.xlu0 %v852, 1
      %v945 = vpop.permute.xlu0 %944
      %946 = vrot.lane.b32.xlu0 %v858, 1
      %v947 = vpop.permute.xlu0 %946
      %948 = vrot.lane.b32.xlu0 %v853, 1
      %v949 = vpop.permute.xlu0 %948
      %950 = vrot.lane.b32.xlu0 %v859, 1
      %v951 = vpop.permute.xlu0 %950
      %v952 = vsel %vm314, %v945, %v947
      %v953 = vsel %vm314, %v949, %v951
      %v958 = vsel %vm314, %v852, %v945
      %v959 = vsel %vm314, %v853, %v949
      %v960 = vsel %vm321, %v852, %v958
      %v961 = vsel %vm322, %v858, %v952
      %v962 = vsel %vm321, %v853, %v959
      %v963 = vsel %vm322, %v859, %v953
      %964 = vrot.lane.b32.xlu0 %v852, 127
      %v965 = vpop.permute.xlu0 %964
      %966 = vrot.lane.b32.xlu0 %v858, 127
      %v967 = vpop.permute.xlu0 %966
      %968 = vrot.lane.b32.xlu0 %v853, 127
      %v969 = vpop.permute.xlu0 %968
      %970 = vrot.lane.b32.xlu0 %v859, 127
      %v971 = vpop.permute.xlu0 %970
      %v972 = vsel %vm329, %v965, %v967
      %v973 = vsel %vm329, %v969, %v971
      %v978 = vsel %vm329, %v967, %v858
      %v979 = vsel %vm329, %v971, %v859
      %v980 = vsel %vm336, %v852, %v972
      %v981 = vsel %vm337, %v858, %v978
      %v982 = vsel %vm336, %v853, %v973
      %v983 = vsel %vm337, %v859, %v979
      %v984 = vld [vmem:[%s3] sm:$0xff]
      %v986 = vcombine.high %v984, %v984
      %v987 = vsel %vm295, %v986, 0
      %989 = vmatprep.subr.mxu0 %v879
      %990 = vmatpush1.msra.mxu0 %v878
      %991 = vmatprep.subr.mxu0 %v881
      %992 = vmatpush1.msra.mxu0 %v880
      %993 = vmatprep.subr.mxu0 %v836
      %994 = vmatpush1.msra.mxu0 %v842
      %995 = vmatprep.subr.mxu0 %v837
      %996 = vmatpush1.msra.mxu0 %v843
      %997 = vmatprep.subr.mxu0 %v899
      %998 = vmatpush1.msra.mxu0 %v898
      %999 = vmatprep.subr.mxu0 %v901
      %1000 = vmatpush1.msra.mxu0 %v900
      %1001 = vmatprep.subr.mxu0 %v919
      %1002 = vmatpush1.msra.mxu0 %v918
      %1003 = vmatprep.subr.mxu0 %v921
      %1004 = vmatpush1.msra.mxu0 %v920
      %1005 = vmatprep.subr.mxu0 %v821
      %1006 = vmatpush1.msra.mxu0 %v820
      %1007 = vmatprep.subr.mxu0 %v823
      %1008 = vmatpush1.msra.mxu0 %v822
      %1009 = vmatprep.subr.mxu0 %v939
      %1010 = vmatpush1.msra.mxu0 %v938
      %1011 = vmatprep.subr.mxu0 %v941
      %1012 = vmatpush1.msra.mxu0 %v940
      %1013 = vmatprep.subr.mxu0 %v961
      %1014 = vmatpush1.msra.mxu0 %v960
      %1015 = vmatprep.subr.mxu0 %v963
      %1016 = vmatpush1.msra.mxu0 %v962
      %1017 = vmatprep.subr.mxu0 %v858
      %1018 = vmatpush1.msra.mxu0 %v852
      %1019 = vmatprep.subr.mxu0 %v859
      %1020 = vmatpush1.msra.mxu0 %v853
      %1021 = vmatprep.subr.mxu0 %v981
      %1022 = vmatpush1.msra.mxu0 %v980
      %1023 = vmatprep.subr.mxu0 %v983
      %1024 = vmatpush1.msra.mxu0 %v982
      %1025 = vmatprep.subr.mxu0 0.0
      %1026 = vmatpush1.msra.mxu0 0.0
      %1027 = vmatprep.subr.mxu0 0.0
      %1028 = vmatpush1.msra.mxu0 0.0
      %1029 = vmatprep.subr.mxu0 0.0
      %1030 = vmatpush1.msra.mxu0 0.0
      %1031 = vmatprep.subr.mxu0 0.0
      %1032 = vmatpush1.msra.mxu0 0.0
      %1033 = vmatprep.subr.mxu0 0.0
      %1034 = vmatpush1.msra.mxu0 0.0
      %1035 = vmatprep.subr.mxu0 0.0
      %1036 = vmatpush1.msra.mxu0 0.0
      %1037 = vmatprep.subr.mxu0 0.0
      %1038 = vmatpush1.msra.mxu0 0.0
      %1039 = vmatprep.subr.mxu0 0.0
      %1040 = vmatpush1.msra.mxu0 0.0
      %1041 = vmatprep.subr.mxu0 0.0
      %1042 = vmatpush1.msra.mxu0 0.0
      %1043 = vmatprep.subr.mxu0 0.0
      %1044 = vmatpush1.msra.mxu0 0.0
      %1045 = vmatprep.subr.mxu0 0.0
      %1046 = vmatpush1.msra.mxu0 0.0
      %1047 = vmatprep.subr.mxu0 0.0
      %1048 = vmatpush1.msra.mxu0 0.0
      %1049 = vmatprep.subr.mxu0 0.0
      %1050 = vmatpush1.msra.mxu0 0.0
      %1051 = vmatprep.subr.mxu0 0.0
      %1052 = vmatpush1.msra.mxu0 0.0
      %1053 = vmatprep.mubr.f32.mxu0 %v987
      %1054 = vmatmul.mubr.f32.gmra.mrb[0].mxu0 %v984
      %v1055 = vpop.f32.mrb[0].mxu0
      %v1056 = vadd.f32 0.0, %v1055
      %v1057 = vpop.f32.mrb[0].mxu0
      %v1058 = vadd.f32 0.0, %v1057
      %1059 = vdwg.mxu0
      %v1060 = vsel %vm457, %v1056, 0.0
      %v1061 = vsel %vm457, %v1058, 0.0
      %v1062 = vadd.f32 %v1060, %v1061
      %1063 = vadd.xlane.f32.xlu0 %v1062
      %v1064 = vpop.xlane.xlu0 %1063
      %v1065 = vmul.f32 %v1056, %v1056
      %v1066 = vmul.f32 %v1058, %v1058
      %v1067 = vsel %vm457, %v1065, 0.0
      %v1068 = vsel %vm457, %v1066, 0.0
      %v1069 = vadd.f32 %v1067, %v1068
      %1070 = vadd.xlane.f32.xlu0 %v1069
      %v1071 = vpop.xlane.xlu0 %1070
      %v1072 = vmul.f32 %v1064, 0.00390625
      %v1073 = vmul.f32 %v1071, 0.00390625
      %v1074 = vmul.f32 %v1072, %v1072
      %v1075 = vsub.f32 %v1073, %v1074
      %v1076 = vmax.f32 %v1075, 0.0
      %v1077 = vsub.f32 %v1056, %v1072
      %v1078 = vsub.f32 %v1058, %v1072
      %v1079 = vadd.f32 %v1076, 1e-05
      %v1080 = vrsqrt.pop %v1079
      %v1081 = vmul.f32 %v1077, %v1080
      %v1082 = vmul.f32 %v1078, %v1080
      %v1083 = vmax.f32 %v1081, 0.0
      %v1084 = vmax.f32 %v1082, 0.0
      %1085 = vst [vmem:[#allocation2 + $0x20] sm:$0xf] %v1083
      %1086 = vst [vmem:[#allocation2 + $0x28] sm:$0xf] %v1084
      %v1087 = vld [vmem:[#allocation2] sm:$0xff]
      %v1088 = vld [vmem:[#allocation2 + $0x8] sm:$0xff]
      %v1089 = vld [vmem:[#allocation2 + $0x10] sm:$0xff]
      %v1090 = vld [vmem:[#allocation2 + $0x18] sm:$0xff]
      %v1091 = vld [vmem:[#allocation2 + $0x20] sm:$0xf]
      %v1092 = vld [vmem:[#allocation2 + $0x28] sm:$0xf]
      %1099 = vrot.lane.b32.xlu0 %v1087, 16
      %v1100 = vpop.permute.xlu0 %1099
      %1101 = vrot.lane.b32.xlu0 %v1088, 16
      %v1102 = vpop.permute.xlu0 %1101
      %1103 = vrot.lane.b32.xlu0 %v1089, 16
      %v1104 = vpop.permute.xlu0 %1103
      %1105 = vrot.lane.b32.xlu0 %v1090, 16
      %v1106 = vpop.permute.xlu0 %1105
      %1107 = vrot.lane.b32.xlu0 %v1091, 16
      %v1108 = vpop.permute.xlu0 %1107
      %1109 = vrot.lane.b32.xlu0 %v1092, 16
      %v1110 = vpop.permute.xlu0 %1109
      %v1111 = vsel %vm295, %v1100, %v1102
      %v1112 = vsel %vm295, %v1104, %v1106
      %v1113 = vsel %vm295, %v1108, %v1110
      %v1120 = vsel %vm295, %v1087, %v1100
      %v1121 = vsel %vm295, %v1089, %v1104
      %v1122 = vsel %vm295, %v1091, %v1108
      %1123 = vrot.lane.b32.xlu0 %v1087, 112
      %v1124 = vpop.permute.xlu0 %1123
      %1125 = vrot.lane.b32.xlu0 %v1088, 112
      %v1126 = vpop.permute.xlu0 %1125
      %1127 = vrot.lane.b32.xlu0 %v1089, 112
      %v1128 = vpop.permute.xlu0 %1127
      %1129 = vrot.lane.b32.xlu0 %v1090, 112
      %v1130 = vpop.permute.xlu0 %1129
      %1131 = vrot.lane.b32.xlu0 %v1091, 112
      %v1132 = vpop.permute.xlu0 %1131
      %1133 = vrot.lane.b32.xlu0 %v1092, 112
      %v1134 = vpop.permute.xlu0 %1133
      %v1135 = vsel %vm304, %v1124, %v1126
      %v1136 = vsel %vm304, %v1128, %v1130
      %v1137 = vsel %vm304, %v1132, %v1134
      %v1144 = vsel %vm304, %v1126, %v1088
      %v1145 = vsel %vm304, %v1130, %v1090
      %v1146 = vsel %vm304, %v1134, %v1092
      %1150 = vrot.lane.b32.xlu0 %v1120, 1
      %v1151 = vpop.permute.xlu0 %1150
      %1152 = vrot.lane.b32.xlu0 %v1111, 1
      %v1153 = vpop.permute.xlu0 %1152
      %1154 = vrot.lane.b32.xlu0 %v1121, 1
      %v1155 = vpop.permute.xlu0 %1154
      %1156 = vrot.lane.b32.xlu0 %v1112, 1
      %v1157 = vpop.permute.xlu0 %1156
      %1158 = vrot.lane.b32.xlu0 %v1122, 1
      %v1159 = vpop.permute.xlu0 %1158
      %1160 = vrot.lane.b32.xlu0 %v1113, 1
      %v1161 = vpop.permute.xlu0 %1160
      %v1162 = vsel %vm314, %v1151, %v1153
      %v1163 = vsel %vm314, %v1155, %v1157
      %v1164 = vsel %vm314, %v1159, %v1161
      %v1171 = vsel %vm314, %v1120, %v1151
      %v1172 = vsel %vm314, %v1121, %v1155
      %v1173 = vsel %vm314, %v1122, %v1159
      %v1174 = vsel %vm321, %v1120, %v1171
      %v1175 = vsel %vm322, %v1111, %v1162
      %v1176 = vsel %vm321, %v1121, %v1172
      %v1177 = vsel %vm322, %v1112, %v1163
      %v1178 = vsel %vm321, %v1122, %v1173
      %v1179 = vsel %vm322, %v1113, %v1164
      %1180 = vrot.lane.b32.xlu0 %v1120, 127
      %v1181 = vpop.permute.xlu0 %1180
      %1182 = vrot.lane.b32.xlu0 %v1111, 127
      %v1183 = vpop.permute.xlu0 %1182
      %1184 = vrot.lane.b32.xlu0 %v1121, 127
      %v1185 = vpop.permute.xlu0 %1184
      %1186 = vrot.lane.b32.xlu0 %v1112, 127
      %v1187 = vpop.permute.xlu0 %1186
      %1188 = vrot.lane.b32.xlu0 %v1122, 127
      %v1189 = vpop.permute.xlu0 %1188
      %1190 = vrot.lane.b32.xlu0 %v1113, 127
      %v1191 = vpop.permute.xlu0 %1190
      %v1192 = vsel %vm329, %v1181, %v1183
      %v1193 = vsel %vm329, %v1185, %v1187
      %v1194 = vsel %vm329, %v1189, %v1191
      %v1201 = vsel %vm329, %v1183, %v1111
      %v1202 = vsel %vm329, %v1187, %v1112
      %v1203 = vsel %vm329, %v1191, %v1113
      %v1204 = vsel %vm336, %v1120, %v1192
      %v1205 = vsel %vm337, %v1111, %v1201
      %v1206 = vsel %vm336, %v1121, %v1193
      %v1207 = vsel %vm337, %v1112, %v1202
      %v1208 = vsel %vm336, %v1122, %v1194
      %v1209 = vsel %vm337, %v1113, %v1203
      %1210 = vrot.lane.b32.xlu0 %v1087, 1
      %v1211 = vpop.permute.xlu0 %1210
      %1212 = vrot.lane.b32.xlu0 %v1088, 1
      %v1213 = vpop.permute.xlu0 %1212
      %1214 = vrot.lane.b32.xlu0 %v1089, 1
      %v1215 = vpop.permute.xlu0 %1214
      %1216 = vrot.lane.b32.xlu0 %v1090, 1
      %v1217 = vpop.permute.xlu0 %1216
      %1218 = vrot.lane.b32.xlu0 %v1091, 1
      %v1219 = vpop.permute.xlu0 %1218
      %1220 = vrot.lane.b32.xlu0 %v1092, 1
      %v1221 = vpop.permute.xlu0 %1220
      %v1222 = vsel %vm314, %v1211, %v1213
      %v1223 = vsel %vm314, %v1215, %v1217
      %v1224 = vsel %vm314, %v1219, %v1221
      %v1231 = vsel %vm314, %v1087, %v1211
      %v1232 = vsel %vm314, %v1089, %v1215
      %v1233 = vsel %vm314, %v1091, %v1219
      %v1234 = vsel %vm321, %v1087, %v1231
      %v1235 = vsel %vm322, %v1088, %v1222
      %v1236 = vsel %vm321, %v1089, %v1232
      %v1237 = vsel %vm322, %v1090, %v1223
      %v1238 = vsel %vm321, %v1091, %v1233
      %v1239 = vsel %vm322, %v1092, %v1224
      %1240 = vrot.lane.b32.xlu0 %v1087, 127
      %v1241 = vpop.permute.xlu0 %1240
      %1242 = vrot.lane.b32.xlu0 %v1088, 127
      %v1243 = vpop.permute.xlu0 %1242
      %1244 = vrot.lane.b32.xlu0 %v1089, 127
      %v1245 = vpop.permute.xlu0 %1244
      %1246 = vrot.lane.b32.xlu0 %v1090, 127
      %v1247 = vpop.permute.xlu0 %1246
      %1248 = vrot.lane.b32.xlu0 %v1091, 127
      %v1249 = vpop.permute.xlu0 %1248
      %1250 = vrot.lane.b32.xlu0 %v1092, 127
      %v1251 = vpop.permute.xlu0 %1250
      %v1252 = vsel %vm329, %v1241, %v1243
      %v1253 = vsel %vm329, %v1245, %v1247
      %v1254 = vsel %vm329, %v1249, %v1251
      %v1261 = vsel %vm329, %v1243, %v1088
      %v1262 = vsel %vm329, %v1247, %v1090
      %v1263 = vsel %vm329, %v1251, %v1092
      %v1264 = vsel %vm336, %v1087, %v1252
      %v1265 = vsel %vm337, %v1088, %v1261
      %v1266 = vsel %vm336, %v1089, %v1253
      %v1267 = vsel %vm337, %v1090, %v1262
      %v1268 = vsel %vm336, %v1091, %v1254
      %v1269 = vsel %vm337, %v1092, %v1263
      %1273 = vrot.lane.b32.xlu0 %v1135, 1
      %v1274 = vpop.permute.xlu0 %1273
      %1275 = vrot.lane.b32.xlu0 %v1144, 1
      %v1276 = vpop.permute.xlu0 %1275
      %1277 = vrot.lane.b32.xlu0 %v1136, 1
      %v1278 = vpop.permute.xlu0 %1277
      %1279 = vrot.lane.b32.xlu0 %v1145, 1
      %v1280 = vpop.permute.xlu0 %1279
      %1281 = vrot.lane.b32.xlu0 %v1137, 1
      %v1282 = vpop.permute.xlu0 %1281
      %1283 = vrot.lane.b32.xlu0 %v1146, 1
      %v1284 = vpop.permute.xlu0 %1283
      %v1285 = vsel %vm314, %v1274, %v1276
      %v1286 = vsel %vm314, %v1278, %v1280
      %v1287 = vsel %vm314, %v1282, %v1284
      %v1294 = vsel %vm314, %v1135, %v1274
      %v1295 = vsel %vm314, %v1136, %v1278
      %v1296 = vsel %vm314, %v1137, %v1282
      %v1297 = vsel %vm321, %v1135, %v1294
      %v1298 = vsel %vm322, %v1144, %v1285
      %v1299 = vsel %vm321, %v1136, %v1295
      %v1300 = vsel %vm322, %v1145, %v1286
      %v1301 = vsel %vm321, %v1137, %v1296
      %v1302 = vsel %vm322, %v1146, %v1287
      %1303 = vrot.lane.b32.xlu0 %v1135, 127
      %v1304 = vpop.permute.xlu0 %1303
      %1305 = vrot.lane.b32.xlu0 %v1144, 127
      %v1306 = vpop.permute.xlu0 %1305
      %1307 = vrot.lane.b32.xlu0 %v1136, 127
      %v1308 = vpop.permute.xlu0 %1307
      %1309 = vrot.lane.b32.xlu0 %v1145, 127
      %v1310 = vpop.permute.xlu0 %1309
      %1311 = vrot.lane.b32.xlu0 %v1137, 127
      %v1312 = vpop.permute.xlu0 %1311
      %1313 = vrot.lane.b32.xlu0 %v1146, 127
      %v1314 = vpop.permute.xlu0 %1313
      %v1315 = vsel %vm329, %v1304, %v1306
      %v1316 = vsel %vm329, %v1308, %v1310
      %v1317 = vsel %vm329, %v1312, %v1314
      %v1324 = vsel %vm329, %v1306, %v1144
      %v1325 = vsel %vm329, %v1310, %v1145
      %v1326 = vsel %vm329, %v1314, %v1146
      %v1327 = vsel %vm336, %v1135, %v1315
      %v1328 = vsel %vm337, %v1144, %v1324
      %v1329 = vsel %vm336, %v1136, %v1316
      %v1330 = vsel %vm337, %v1145, %v1325
      %v1331 = vsel %vm336, %v1137, %v1317
      %v1332 = vsel %vm337, %v1146, %v1326
      %v1333 = vrot.slane %v1120, 4
      %v1334 = vrot.slane %v1111, 4
      %v1335 = vrot.slane %v1121, 4
      %v1336 = vsel %vm457, %v1333, %v1335
      %v1337 = vrot.slane %v1112, 4
      %v1338 = vsel %vm457, %v1334, %v1337
      %v1339 = vrot.slane %v1122, 4
      %v1340 = vsel %vm457, %v1335, %v1339
      %v1341 = vrot.slane %v1113, 4
      %v1342 = vsel %vm457, %v1337, %v1341
      %v1355 = vrot.slane %v1234, 4
      %v1356 = vrot.slane %v1235, 4
      %v1357 = vrot.slane %v1236, 4
      %v1358 = vsel %vm457, %v1355, %v1357
      %v1359 = vrot.slane %v1237, 4
      %v1360 = vsel %vm457, %v1356, %v1359
      %v1361 = vrot.slane %v1238, 4
      %v1362 = vsel %vm457, %v1357, %v1361
      %v1363 = vrot.slane %v1239, 4
      %v1364 = vsel %vm457, %v1359, %v1363
      %v1377 = vrot.slane %v1264, 4
      %v1378 = vrot.slane %v1265, 4
      %v1379 = vrot.slane %v1266, 4
      %v1380 = vsel %vm457, %v1377, %v1379
      %v1381 = vrot.slane %v1267, 4
      %v1382 = vsel %vm457, %v1378, %v1381
      %v1383 = vrot.slane %v1268, 4
      %v1384 = vsel %vm457, %v1379, %v1383
      %v1385 = vrot.slane %v1269, 4
      %v1386 = vsel %vm457, %v1381, %v1385
      %v1393 = vrot.slane %v1135, 4
      %v1394 = vrot.slane %v1144, 4
      %v1395 = vrot.slane %v1136, 4
      %v1396 = vsel %vm457, %v1393, %v1395
      %v1397 = vrot.slane %v1145, 4
      %v1398 = vsel %vm457, %v1394, %v1397
      %v1399 = vrot.slane %v1137, 4
      %v1400 = vsel %vm457, %v1395, %v1399
      %v1401 = vrot.slane %v1146, 4
      %v1402 = vsel %vm457, %v1397, %v1401
      %v1409 = vsel %vm457, %v1178, %v1333
      %v1410 = vsel %vm457, %v1179, %v1334
      %v1411 = vsel %vm457, %v1208, %v1355
      %v1412 = vsel %vm457, %v1209, %v1356
      %v1413 = vsel %vm457, %v1091, %v1377
      %v1414 = vsel %vm457, %v1092, %v1378
      %v1415 = vsel %vm457, %v1301, %v1393
      %v1416 = vsel %vm457, %v1302, %v1394
      %v1417 = vld [vmem:[%s4] sm:$0xff]
      %v1419 = vcombine.high %v1417, %v1417
      %vm1420 = vcmask 424960
      %v1421 = vsel %vm1420, %v1419, 0
      %v1424 = vsel %vm457, %v1331, 0
      %v1427 = vsel %vm457, %v1332, 0
      %1429 = vmatprep.subr.mxu0 %v1175
      %1430 = vmatpush1.msra.mxu0 %v1174
      %1431 = vmatprep.subr.mxu0 %v1177
      %1432 = vmatpush1.msra.mxu0 %v1176
      %1433 = vmatprep.subr.mxu0 %v1410
      %1434 = vmatpush1.msra.mxu0 %v1409
      %1435 = vmatprep.subr.mxu0 %v1338
      %1436 = vmatpush1.msra.mxu0 %v1336
      %1437 = vmatprep.subr.mxu0 %v1342
      %1438 = vmatpush1.msra.mxu0 %v1340
      %1439 = vmatprep.subr.mxu0 %v1205
      %1440 = vmatpush1.msra.mxu0 %v1204
      %1441 = vmatprep.subr.mxu0 %v1207
      %1442 = vmatpush1.msra.mxu0 %v1206
      %1443 = vmatprep.subr.mxu0 %v1412
      %1444 = vmatpush1.msra.mxu0 %v1411
      %1445 = vmatprep.subr.mxu0 %v1360
      %1446 = vmatpush1.msra.mxu0 %v1358
      %1447 = vmatprep.subr.mxu0 %v1364
      %1448 = vmatpush1.msra.mxu0 %v1362
      %1449 = vmatprep.subr.mxu0 %v1088
      %1450 = vmatpush1.msra.mxu0 %v1087
      %1451 = vmatprep.subr.mxu0 %v1090
      %1452 = vmatpush1.msra.mxu0 %v1089
      %1453 = vmatprep.subr.mxu0 %v1414
      %1454 = vmatpush1.msra.mxu0 %v1413
      %1455 = vmatprep.subr.mxu0 %v1382
      %1456 = vmatpush1.msra.mxu0 %v1380
      %1457 = vmatprep.subr.mxu0 %v1386
      %1458 = vmatpush1.msra.mxu0 %v1384
      %1459 = vmatprep.subr.mxu0 %v1298
      %1460 = vmatpush1.msra.mxu0 %v1297
      %1461 = vmatprep.subr.mxu0 %v1300
      %1462 = vmatpush1.msra.mxu0 %v1299
      %1463 = vmatprep.subr.mxu0 %v1416
      %1464 = vmatpush1.msra.mxu0 %v1415
      %1465 = vmatprep.subr.mxu0 %v1398
      %1466 = vmatpush1.msra.mxu0 %v1396
      %1467 = vmatprep.subr.mxu0 %v1402
      %1468 = vmatpush1.msra.mxu0 %v1400
      %1469 = vmatprep.subr.mxu0 %v1328
      %1470 = vmatpush1.msra.mxu0 %v1327
      %1471 = vmatprep.subr.mxu0 %v1330
      %1472 = vmatpush1.msra.mxu0 %v1329
      %1473 = vmatprep.subr.mxu0 %v1427
      %1474 = vmatpush1.msra.mxu0 %v1424
      %1475 = vmatprep.subr.mxu0 0.0
      %1476 = vmatpush1.msra.mxu0 0.0
      %1477 = vmatprep.subr.mxu0 0.0
      %1478 = vmatpush1.msra.mxu0 0.0
      %1479 = vmatprep.subr.mxu0 0.0
      %1480 = vmatpush1.msra.mxu0 0.0
      %1481 = vmatprep.subr.mxu0 0.0
      %1482 = vmatpush1.msra.mxu0 0.0
      %1483 = vmatprep.subr.mxu0 0.0
      %1484 = vmatpush1.msra.mxu0 0.0
      %1485 = vmatprep.subr.mxu0 0.0
      %1486 = vmatpush1.msra.mxu0 0.0
      %1487 = vmatprep.subr.mxu0 0.0
      %1488 = vmatpush1.msra.mxu0 0.0
      %1489 = vmatprep.subr.mxu0 0.0
      %1490 = vmatpush1.msra.mxu0 0.0
      %1491 = vmatprep.subr.mxu0 0.0
      %1492 = vmatpush1.msra.mxu0 0.0
      %1493 = vmatprep.mubr.f32.mxu0 %v1421
      %1494 = vmatmul.mubr.f32.gmra.mrb[0].mxu0 %v1417
      %v1495 = vpop.f32.mrb[0].mxu0
      %v1496 = vadd.f32 0.0, %v1495
      %v1497 = vpop.f32.mrb[0].mxu0
      %v1498 = vadd.f32 0.0, %v1497
      %1499 = vdwg.mxu0
      %v1500 = vsel %vm457, %v1496, 0.0
      %v1501 = vsel %vm457, %v1498, 0.0
      %v1502 = vadd.f32 %v1500, %v1501
      %1503 = vadd.xlane.f32.xlu0 %v1502
      %v1504 = vpop.xlane.xlu0 %1503
      %v1505 = vmul.f32 %v1496, %v1496
      %v1506 = vmul.f32 %v1498, %v1498
      %v1507 = vsel %vm457, %v1505, 0.0
      %v1508 = vsel %vm457, %v1506, 0.0
      %v1509 = vadd.f32 %v1507, %v1508
      %1510 = vadd.xlane.f32.xlu0 %v1509
      %v1511 = vpop.xlane.xlu0 %1510
      %v1512 = vmul.f32 %v1504, 0.00390625
      %v1513 = vmul.f32 %v1511, 0.00390625
      %v1514 = vmul.f32 %v1512, %v1512
      %v1515 = vsub.f32 %v1513, %v1514
      %v1516 = vmax.f32 %v1515, 0.0
      %v1517 = vsub.f32 %v1496, %v1512
      %v1518 = vsub.f32 %v1498, %v1512
      %v1519 = vadd.f32 %v1516, 1e-05
      %v1520 = vrsqrt.pop %v1519
      %v1521 = vmul.f32 %v1517, %v1520
      %v1522 = vmul.f32 %v1518, %v1520
      %v1523 = vmax.f32 %v1521, 0.0
      %v1524 = vmax.f32 %v1522, 0.0
      %v1527 = vrot.slane %v1523, 4
      %v1528 = vrot.slane %v1524, 4
      %1531 = vst [vmem:[#allocation2 + $0x20] sm:$0xf0] %v1527
      %1532 = vst [vmem:[#allocation2 + $0x28] sm:$0xf0] %v1528
      %v1533 = vld [vmem:[%s5] sm:$0xff]
      %v1534 = vld [vmem:[#allocation2] sm:$0xff]
      %v1535 = vld [vmem:[#allocation2 + $0x8] sm:$0xff]
      %v1536 = vld [vmem:[#allocation2 + $0x10] sm:$0xff]
      %v1537 = vld [vmem:[#allocation2 + $0x18] sm:$0xff]
      %v1538 = vld [vmem:[#allocation2 + $0x20] sm:$0xff]
      %v1539 = vld [vmem:[#allocation2 + $0x28] sm:$0xff]
      %vm1540 = vcmask 195584
      %v1542 = vsel %vm1540, %v1533, 0
      %1544 = vmatprep.subr.mxu0 %v1535
      %1545 = vmatpush1.msra.mxu0 %v1534
      %1546 = vmatprep.subr.mxu0 %v1537
      %1547 = vmatpush1.msra.mxu0 %v1536
      %1548 = vmatprep.subr.mxu0 %v1539
      %1549 = vmatpush1.msra.mxu0 %v1538
      %1550 = vmatprep.subr.mxu0 0.0
      %1551 = vmatpush1.msra.mxu0 0.0
      %1552 = vmatprep.subr.mxu0 0.0
      %1553 = vmatpush1.msra.mxu0 0.0
      %1554 = vmatprep.subr.mxu0 0.0
      %1555 = vmatpush1.msra.mxu0 0.0
      %1556 = vmatprep.subr.mxu0 0.0
      %1557 = vmatpush1.msra.mxu0 0.0
      %1558 = vmatprep.subr.mxu0 0.0
      %1559 = vmatpush1.msra.mxu0 0.0
      %1560 = vmatprep.subr.mxu0 0.0
      %1561 = vmatpush1.msra.mxu0 0.0
      %1562 = vmatprep.subr.mxu0 0.0
      %1563 = vmatpush1.msra.mxu0 0.0
      %1564 = vmatprep.subr.mxu0 0.0
      %1565 = vmatpush1.msra.mxu0 0.0
      %1566 = vmatprep.subr.mxu0 0.0
      %1567 = vmatpush1.msra.mxu0 0.0
      %1568 = vmatprep.subr.mxu0 0.0
      %1569 = vmatpush1.msra.mxu0 0.0
      %1570 = vmatprep.subr.mxu0 0.0
      %1571 = vmatpush1.msra.mxu0 0.0
      %1572 = vmatprep.subr.mxu0 0.0
      %1573 = vmatpush1.msra.mxu0 0.0
      %1574 = vmatprep.subr.mxu0 0.0
      %1575 = vmatpush1.msra.mxu0 0.0
      %1576 = vmatprep.subr.mxu0 0.0
      %1577 = vmatpush1.msra.mxu0 0.0
      %1578 = vmatprep.subr.mxu0 0.0
      %1579 = vmatpush1.msra.mxu0 0.0
      %1580 = vmatprep.subr.mxu0 0.0
      %1581 = vmatpush1.msra.mxu0 0.0
      %1582 = vmatprep.subr.mxu0 0.0
      %1583 = vmatpush1.msra.mxu0 0.0
      %1584 = vmatprep.subr.mxu0 0.0
      %1585 = vmatpush1.msra.mxu0 0.0
      %1586 = vmatprep.subr.mxu0 0.0
      %1587 = vmatpush1.msra.mxu0 0.0
      %1588 = vmatprep.subr.mxu0 0.0
      %1589 = vmatpush1.msra.mxu0 0.0
      %1590 = vmatprep.subr.mxu0 0.0
      %1591 = vmatpush1.msra.mxu0 0.0
      %1592 = vmatprep.subr.mxu0 0.0
      %1593 = vmatpush1.msra.mxu0 0.0
      %1594 = vmatprep.subr.mxu0 0.0
      %1595 = vmatpush1.msra.mxu0 0.0
      %1596 = vmatprep.subr.mxu0 0.0
      %1597 = vmatpush1.msra.mxu0 0.0
      %1598 = vmatprep.subr.mxu0 0.0
      %1599 = vmatpush1.msra.mxu0 0.0
      %1600 = vmatprep.subr.mxu0 0.0
      %1601 = vmatpush1.msra.mxu0 0.0
      %1602 = vmatprep.subr.mxu0 0.0
      %1603 = vmatpush1.msra.mxu0 0.0
      %1604 = vmatprep.subr.mxu0 0.0
      %1605 = vmatpush1.msra.mxu0 0.0
      %1606 = vmatprep.subr.mxu0 0.0
      %1607 = vmatpush1.msra.mxu0 0.0
      %1608 = vmatprep.mubr.f32.mxu0 0.0
      %1609 = vmatmul.mubr.f32.gmra.mrb[0].mxu0 %v1542
      %v1610 = vpop.f32.mrb[0].mxu0
      %v1611 = vadd.f32 0.0, %v1610
      %v1612 = vpop.f32.mrb[0].mxu0
      %v1613 = vadd.f32 0.0, %v1612
      %1614 = vdwg.mxu0
      %v1615 = vadd.f32 %v1611, %v1613
      %1616 = vadd.xlane.f32.xlu0 %v1615
      %v1617 = vpop.xlane.xlu0 %1616
      %v1618 = vmul.f32 %v1611, %v1611
      %v1619 = vmul.f32 %v1613, %v1613
      %v1620 = vadd.f32 %v1618, %v1619
      %1621 = vadd.xlane.f32.xlu0 %v1620
      %v1622 = vpop.xlane.xlu0 %1621
      %v1623 = vmul.f32 %v1617, 0.00390625
      %v1624 = vmul.f32 %v1622, 0.00390625
      %v1625 = vmul.f32 %v1623, %v1623
      %v1626 = vsub.f32 %v1624, %v1625
      %v1627 = vmax.f32 %v1626, 0.0
      %v1628 = vsub.f32 %v1611, %v1623
      %v1629 = vsub.f32 %v1613, %v1623
      %v1630 = vadd.f32 %v1627, 1e-05
      %v1631 = vrsqrt.pop %v1630
      %v1632 = vmul.f32 %v1628, %v1631
      %v1633 = vmul.f32 %v1629, %v1631
      %v1634 = vmax.f32 %v1632, 0.0
      %v1635 = vmax.f32 %v1633, 0.0
      %v1636 = vadd.f32 %v283, %v1634
      %v1637 = vadd.f32 %v284, %v1635
      %1638 = vst [vmem:[%s251] sm:$0xff] %v1636
      %1639 = vst [vmem:[%s251 + $0x8] sm:$0xff] %v1637
      %p1640 = scmp.lt.s32.totalorder %s17, 1
      %s1641 = scalar_select %p1640, %s17, 1
      %s1642 = smul.addr %s1641, 2
      %s1643 = smul.addr %s1642, 8
      %s1644 = scalar_lea.vmem %s6, %s1643
      // Predicated region
      $region45: #{residual_dense_block_2d.1} parent=43 // pred_check
        %p1645 = pneg %p166
      $region46: #{residual_dense_block_2d.1} parent=43 // pred_check_branch
        %1647 = sbr.rel (%p1645) target = $region48
      $region47: #{residual_dense_block_2d.1} parent=43 // pred_region
        _
      $region48: #{residual_dense_block_2d.1} parent=43 // pred_fallthru
        _
    $region44: #{residual_dense_block_2d.1} parent=5 // pred_fallthru
      _
    %p1648 = scmp.le.s32.totalorder 2, %s12
    // Predicated region
    $region49: #{residual_dense_block_2d.1} parent=5 // pred_check
      %p1649 = pneg %p1648
    $region50: #{residual_dense_block_2d.1} parent=5 // pred_check_branch
      %1651 = sbr.rel (%p1649) target = $region52
    $region51: #{residual_dense_block_2d.1} parent=5 // pred_region
      %s1652 = ssub.s32 %s12, 2
      // Predicated region
      $region53: #{residual_dense_block_2d.1} parent=51 // pred_check
        %p1653 = pneg %p172
      $region54: #{residual_dense_block_2d.1} parent=51 // pred_check_branch
        %1655 = sbr.rel (%p1653) target = $region56
      $region55: #{residual_dense_block_2d.1} parent=51 // pred_region
        %p1656 = scmp.lt.s32.totalorder %s18, 1
        %s1657 = scalar_select %p1656, %s18, 1
        %s1658 = smul.addr %s1657, 2
        %s1659 = smul.addr %s1658, 8
        %s1660 = scalar_lea.vmem %s6, %s1659
      $region56: #{residual_dense_block_2d.1} parent=51 // pred_fallthru
        _
    $region52: #{residual_dense_block_2d.1} parent=5 // pred_fallthru
      _
  $region6: #{residual_dense_block_2d.1} parent=0 // loop_footer
    %s16 = sadd.s32 1, %s12
  $region7: #{residual_dense_block_2d.1} parent=0 // loop_footer_branch
    %11 = sbr.rel target = $region3
  $region8: #{residual_dense_block_2d.1} parent=0 // loop_exit
    _

</llo_original>
